<compile_context>
chip_gen: v7x
topology: tpu7x:2x2x1
jax: 0.10.0
libtpu: 0.0.40
codegen_flags: <defaults>
</compile_context>

<pallas_src>
import functools

import jax
import jax.numpy as jnp
from jax.experimental import pallas as pl
from jax.experimental.pallas import tpu as pltpu


def _round_up(x, m):
    return (x + m - 1) // m * m


def _conv_stats_kernel(x_hbm, w_ref, mask_ref,
                       y_ref, mean_ref, rstd_ref,
                       win_ref, sem_ref, col_ref, ssum_ref, ssq_ref,
                       *, tap_offsets, group, ce_p, tile_s, win_s, s_count, eps):
    """Pass 1: manual-DMA halo window -> im2col -> deep MXU matmul(s) -> bf16 y,
    plus masked per-channel sum / sum-of-squares accumulated across lane tiles."""
    nb = pl.program_id(0)
    t = pl.program_id(2)
    n_tiles = pl.num_programs(2)
    T = tile_s
    ktaps = len(tap_offsets)
    slot = t % 2

    def dma(tile_idx, buf_slot):
        src = pl.multiple_of(tile_idx * T, 128)
        return pltpu.make_async_copy(
            x_hbm.at[nb, :, pl.ds(src, win_s)],
            win_ref.at[pl.ds(buf_slot * ce_p, ce_p), :],
            sem_ref.at[buf_slot])

    @pl.when(t == 0)
    def _():
        dma(t, slot).start()                       # prime the input pipeline
        ssum_ref[...] = jnp.zeros_like(ssum_ref)
        ssq_ref[...] = jnp.zeros_like(ssq_ref)

    @pl.when(t + 1 < n_tiles)
    def _():
        dma(t + 1, 1 - slot).start()               # prefetch next tile's window

    dma(t, slot).wait()                            # current window ready

    row0 = pl.multiple_of(slot * ce_p, ce_p)

    def window(off):                               # (Ce_p, T) bf16, lane-shifted view
        return win_ref[pl.ds(row0, ce_p), pl.ds(off, T)]

    # Conv: taps folded into the matmul contraction (grouped deep matmuls),
    # partial group results accumulated in a traced f32 value.
    if ktaps == 1:
        acc = jnp.dot(w_ref[...], window(tap_offsets[0]),
                      preferred_element_type=jnp.float32)
    else:
        ngroups = -(-ktaps // group)
        acc = None
        for g in range(ngroups):
            offs = tap_offsets[g * group:(g + 1) * group]
            for j, off in enumerate(offs):
                col_ref[j * ce_p:(j + 1) * ce_p, :] = window(off)
            rows = len(offs) * ce_p
            c0 = g * group * ce_p
            part = jnp.dot(w_ref[:, c0:c0 + rows], col_ref[0:rows, :],
                           preferred_element_type=jnp.float32)
            acc = part if acc is None else acc + part

    y_ref[0] = acc.astype(y_ref.dtype)             # single bf16 store of the tile

    # Cross-tile InstanceNorm statistics (mask selects valid output lattice points).
    # TODO(synk): E[y^2]-mean^2 in f32 can lose precision if |mean| >> std; a
    # shifted/Welford-style update would be safer.
    m = mask_ref[...]                              # (1, T) f32
    ym = acc * m
    ssum_ref[...] += jnp.sum(ym, axis=1, keepdims=True)
    ssq_ref[...] += jnp.sum(ym * acc, axis=1, keepdims=True)

    @pl.when(t == n_tiles - 1)
    def _():
        inv_n = 1.0 / s_count
        mean = ssum_ref[...] * inv_n
        var = jnp.maximum(ssq_ref[...] * inv_n - mean * mean, 0.0)
        mean_ref[0] = mean
        rstd_ref[0] = jax.lax.rsqrt(var + eps)


def _norm_act_kernel(y_ref, mean_ref, rstd_ref, o_ref, *, negative_slope,
                     activation, c_out):
    """Pass 2: (y - mean) * rstd (+ LeakyReLU); writes only the true Cout channels."""
    y = y_ref[0].astype(jnp.float32)
    o = (y - mean_ref[0]) * rstd_ref[0]
    if activation:
        o = jnp.where(o >= 0, o, negative_slope * o)
    o_ref[0] = o[:c_out, :].astype(o_ref.dtype)


@functools.partial(jax.jit, static_argnames=(
    "stride", "padding", "activation", "eps", "negative_slope", "tile_s", "tile_co"))
def conv3d_bn_forward(x, weight, *, stride=1, padding=0, activation=True,
                      eps=1e-5, negative_slope=0.01, tile_s=None, tile_co=128):
    """Forward of conv3d_bn.

    x:      (N, Cin, D, H, W)      float32 (NCDHW, like PyTorch)
    weight: (Cout, Cin, K, K, K)   float32 (Conv3d weight, bias=False)
    returns (N, Cout, Dout, Hout, Wout)
    """
    N, Cin, D, H, W = x.shape
    Cout, cin_w, K, k2, k3 = weight.shape
    assert cin_w == Cin and K == k2 == k3
    s, p = int(stride), int(padding)

    Dout = (D + 2 * p - K) // s + 1
    Hout = (H + 2 * p - K) // s + 1
    Wout = (W + 2 * p - K) // s + 1
    S = Dout * Hout * Wout

    # Polyphase decomposition: a stride-s K^3 conv == a stride-1 Kq^3 conv over
    # s^3*Cin phase-subsampled channels on the (Dq, Hq, Wq) output lattice.
    Kq = -(-K // s)
    Dq, Hq, Wq = Dout + Kq - 1, Hout + Kq - 1, Wout + Kq - 1
    Sq = Dq * Hq * Wq
    Ce = Cin * s * s * s
    Ktaps = Kq * Kq * Kq

    Ce_p = _round_up(Ce, 16)                       # bf16 sublane packing
    Cout_p = _round_up(Cout, 16)
    tco = _round_up(int(tile_co), 16)
    if Cout_p > tco:
        Cb = tco
        Cout_p = _round_up(Cout_p, Cb)
    else:
        Cb = Cout_p
    n_cblk = Cout_p // Cb

    # Per-generation VMEM budget / default lane tile.
    try:
        vmem_cap = int(pltpu.get_tpu_info().vmem_capacity_bytes)
    except Exception:
        vmem_cap = 64 * 1024 * 1024
    vmem_limit = min(int(vmem_cap * 0.7), 112 * 1024 * 1024)
    ts = tile_s if tile_s is not None else (8192 if vmem_cap >= 96 * 1024 * 1024 else 4096)

    T = max(128, min(_round_up(int(ts), 128), _round_up(Sq, 128)))
    n_tiles = -(-Sq // T)
    Tn = n_tiles * T

    # Tap offsets on the flattened (Dq, Hq, Wq) stride-1 lattice.
    tap_offsets = tuple((qd * Hq + qh) * Wq + qw
                        for qd in range(Kq) for qh in range(Kq) for qw in range(Kq))
    maxoff = tap_offsets[-1]
    halo = _round_up(maxoff, 128) if maxoff > 0 else 0
    Twin = T + halo
    L = Tn + halo

    # Taps per matmul group (bounded im2col scratch, deep MXU contraction).
    G = max(1, min(Ktaps, (4 * 1024 * 1024) // (Ce_p * T * 2)))

    # ---- XLA glue: pad, phase-subsample, flatten spatial, cast to bf16 -----------
    Dpad = max(D + 2 * p, s * Dq)
    Hpad = max(H + 2 * p, s * Hq)
    Wpad = max(W + 2 * p, s * Wq)
    xp = jnp.pad(x, ((0, 0), (0, 0),
                     (p, Dpad - D - p), (p, Hpad - H - p), (p, Wpad - W - p)))
    if s == 1:
        xe = xp                                          # (N, Cin, Dq, Hq, Wq)
    else:
        parts = []
        for rd in range(s):
            for rh in range(s):
                for rw in range(s):
                    parts.append(xp[:, :,
                                    rd:rd + s * (Dq - 1) + 1:s,
                                    rh:rh + s * (Hq - 1) + 1:s,
                                    rw:rw + s * (Wq - 1) + 1:s])
        xe = jnp.concatenate(parts, axis=1)              # (N, s^3*Cin, Dq, Hq, Wq)
    xin = jnp.pad(xe.reshape(N, Ce, Sq),
                  ((0, 0), (0, Ce_p - Ce), (0, L - Sq))).astype(jnp.bfloat16)

    # Weight -> (Cout_p, Ktaps*Ce_p); column index = tap*Ce_p + effective channel.
    Kpad = Kq * s
    wp = jnp.pad(weight, ((0, 0), (0, 0),
                          (0, Kpad - K), (0, Kpad - K), (0, Kpad - K)))
    wr = wp.reshape(Cout, Cin, Kq, s, Kq, s, Kq, s)
    wr = jnp.transpose(wr, (0, 2, 4, 6, 3, 5, 7, 1))     # (Cout, Kq,Kq,Kq, s,s,s, Cin)
    wr = wr.reshape(Cout, Ktaps, Ce)
    w2 = jnp.pad(wr, ((0, Cout_p - Cout), (0, 0), (0, Ce_p - Ce)))
    w2 = w2.reshape(Cout_p, Ktaps * Ce_p).astype(jnp.bfloat16)

    # Validity mask over the flattened (Dq, Hq, Wq) lattice (true output points).
    idx = jnp.arange(Tn, dtype=jnp.int32)
    wq_i = idx % Wq
    rest = idx // Wq
    hq_i = rest % Hq
    dq_i = rest // Hq
    mask = ((dq_i < Dout) & (hq_i < Hout) & (wq_i < Wout)).astype(jnp.float32)
    mask = mask.reshape(1, Tn)

    # ---- pass 1: fused conv + cross-tile InstanceNorm statistics -----------------
    kernel1 = functools.partial(
        _conv_stats_kernel, tap_offsets=tap_offsets, group=G, ce_p=Ce_p,
        tile_s=T, win_s=Twin, s_count=float(S), eps=float(eps))
    y_raw, mean, rstd = pl.pallas_call(
        kernel1,
        out_shape=(
            jax.ShapeDtypeStruct((N, Cout_p, Tn), jnp.bfloat16),
            jax.ShapeDtypeStruct((N, Cout_p, 1), jnp.float32),
            jax.ShapeDtypeStruct((N, Cout_p, 1), jnp.float32),
        ),
        grid_spec=pltpu.PrefetchScalarGridSpec(
            num_scalar_prefetch=0,
            grid=(N, n_cblk, n_tiles),
            in_specs=[
                pl.BlockSpec(memory_space=pl.ANY),                            # x (manual DMA)
                pl.BlockSpec((Cb, Ktaps * Ce_p), lambda n, c, t: (c, 0)),     # weights
                pl.BlockSpec((1, T), lambda n, c, t: (0, t)),                 # validity mask
            ],
            out_specs=(
                pl.BlockSpec((1, Cb, T), lambda n, c, t: (n, c, t)),
                pl.BlockSpec((1, Cb, 1), lambda n, c, t: (n, c, 0)),
                pl.BlockSpec((1, Cb, 1), lambda n, c, t: (n, c, 0)),
            ),
            scratch_shapes=[
                pltpu.VMEM((2 * Ce_p, Twin), jnp.bfloat16),  # double-buffered halo window
                pltpu.SemaphoreType.DMA((2,)),
                pltpu.VMEM((G * Ce_p, T), jnp.bfloat16),     # im2col (contraction) stack
                pltpu.VMEM((Cb, 1), jnp.float32),            # running sum
                pltpu.VMEM((Cb, 1), jnp.float32),            # running sum of squares
            ]),
        compiler_params=pltpu.CompilerParams(
            dimension_semantics=("parallel", "parallel", "arbitrary"),
            vmem_limit_bytes=vmem_limit),
    )(xin, w2, mask)

    # ---- pass 2: normalize + LeakyReLU, write only the true Cout channels --------
    kernel2 = functools.partial(_norm_act_kernel,
                                negative_slope=float(negative_slope),
                                activation=bool(activation), c_out=Cout)
    y_norm = pl.pallas_call(
        kernel2,
        out_shape=jax.ShapeDtypeStruct((N, Cout, Tn), x.dtype),
        grid_spec=pltpu.PrefetchScalarGridSpec(
            num_scalar_prefetch=0,
            grid=(N, n_tiles),
            in_specs=[
                pl.BlockSpec((1, Cout_p, T), lambda n, t: (n, 0, t)),
                pl.BlockSpec((1, Cout_p, 1), lambda n, t: (n, 0, 0)),
                pl.BlockSpec((1, Cout_p, 1), lambda n, t: (n, 0, 0)),
            ],
            out_specs=pl.BlockSpec((1, Cout, T), lambda n, t: (n, 0, t)),
        ),
        compiler_params=pltpu.CompilerParams(
            dimension_semantics=("parallel", "parallel"),
            vmem_limit_bytes=vmem_limit),
    )(y_raw, mean, rstd)

    # TODO(synk): fold the (Dq,Hq,Wq)->(Dout,Hout,Wout) overlap trim into pass 2
    # (needs lane compaction); for pointwise convs (K=1) it is already a no-op.
    y = y_norm[:, :, :Sq].reshape(N, Cout, Dq, Hq, Wq)
    return y[:, :, :Dout, :Hout, :Wout]


def _reference(x, weight, *, stride, padding, activation,
               eps=1e-5, negative_slope=0.01):
    # Pure-JAX reference (mirrors PyTorch semantics) for correctness checking.
    y = jax.lax.conv_general_dilated(
        x, weight, window_strides=(stride,) * 3,
        padding=[(padding, padding)] * 3,
        dimension_numbers=("NCDHW", "OIDHW", "NCDHW"))
    mean = jnp.mean(y, axis=(2, 3, 4), keepdims=True)
    var = jnp.mean((y - mean) ** 2, axis=(2, 3, 4), keepdims=True)
    yn = (y - mean) / jnp.sqrt(var + eps)
    if activation:
        yn = jnp.where(yn >= 0, yn, negative_slope * yn)
    return yn


if __name__ == "__main__":
    key = jax.random.PRNGKey(0)
    kx, kw1, kw3 = jax.random.split(key, 3)

    N, Cin, Cout, D, H, W = 2, 4, 8, 8, 8, 8
    x = jax.random.normal(kx, (N, Cin, D, H, W), dtype=jnp.float32)

    # bf16 matmul operands / bf16 intermediate vs f32 reference -> relaxed tolerance.
    ATOL = RTOL = 5e-2

    # Case 1: module defaults (kernel_size=1, stride=1, padding=0, activation=True).
    w1 = jax.random.normal(kw1, (Cout, Cin, 1, 1, 1), dtype=jnp.float32) * 0.1
    out1 = jax.block_until_ready(conv3d_bn_forward(x, w1))
    ref1 = _reference(x, w1, stride=1, padding=0, activation=True)
    assert out1.shape == (N, Cout, D, H, W)
    assert jnp.allclose(out1, ref1, atol=ATOL, rtol=RTOL)

    # Case 2: kernel_size=3, padding=1; small lane tile so the multi-tile
    # cross-tile InstanceNorm accumulation + halo-window DMA path is exercised.
    w3 = jax.random.normal(kw3, (Cout, Cin, 3, 3, 3), dtype=jnp.float32) * 0.1
    out3 = jax.block_until_ready(
        conv3d_bn_forward(x, w3, stride=1, padding=1, tile_s=256))
    ref3 = _reference(x, w3, stride=1, padding=1, activation=True)
    assert out3.shape == (N, Cout, D, H, W)
    assert jnp.allclose(out3, ref3, atol=ATOL, rtol=RTOL)

    # Case 3: strided conv (kernel_size=3, stride=2, padding=1) -> polyphase path.
    out_s = jax.block_until_ready(
        conv3d_bn_forward(x, w3, stride=2, padding=1, tile_s=256))
    ref_s = _reference(x, w3, stride=2, padding=1, activation=True)
    assert out_s.shape == (N, Cout, 4, 4, 4)
    assert jnp.allclose(out_s, ref_s, atol=ATOL, rtol=RTOL)

    print("KERNEL_OK")
</pallas_src>

<mosaic_0001>
module attributes {stable_mosaic.version = 11 : i64} {
  func.func @_conv_stats_kernel(%arg0: i32, %arg1: i32, %arg2: i32, %arg3: memref<2x16x512xbf16, #tpu.memory_space<any>>, %arg4: memref<16x16xbf16, #tpu.memory_space<vmem>>, %arg5: memref<1x512xf32, #tpu.memory_space<vmem>>, %arg6: memref<1x16x512xbf16, #tpu.memory_space<vmem>>, %arg7: memref<1x16x1xf32, #tpu.memory_space<vmem>>, %arg8: memref<1x16x1xf32, #tpu.memory_space<vmem>>, %arg9: memref<32x512xbf16, #tpu.memory_space<vmem>>, %arg10: memref<2x!tpu.dma_semaphore, #tpu.memory_space<semaphore_mem>>, %arg11: memref<16x512xbf16, #tpu.memory_space<vmem>>, %arg12: memref<16x1xf32, #tpu.memory_space<vmem>>, %arg13: memref<16x1xf32, #tpu.memory_space<vmem>>) attributes {dimension_semantics = [#tpu.dimension_semantics<parallel>, #tpu.dimension_semantics<parallel>, #tpu.dimension_semantics<arbitrary>], iteration_bounds = array<i64: 2, 1, 1>, scalar_prefetch = 0 : i64, scratch_operands = 5 : i64, tpu.core_type = #tpu.core_type<tc>, window_params = [{}, {transform_indices = @transform_1, window_bounds = array<i64: 16, 16>}, {transform_indices = @transform_2, window_bounds = array<i64: 1, 512>}, {transform_indices = @transform_3, window_bounds = array<i64: 1, 16, 512>}, {transform_indices = @transform_4, window_bounds = array<i64: 1, 16, 1>}, {transform_indices = @transform_5, window_bounds = array<i64: 1, 16, 1>}]} {
    %c2_i32 = arith.constant 2 : i32
    %c0_i32 = arith.constant 0 : i32
    %0 = arith.cmpi eq, %c2_i32, %c0_i32 : i32
    %c1_i32 = arith.constant 1 : i32
    %1 = arith.select %0, %c1_i32, %c2_i32 : i32
    %2 = arith.remsi %arg2, %1 : i32
    %c0_i32_0 = arith.constant 0 : i32
    %3 = arith.cmpi ne, %2, %c0_i32_0 : i32
    %c0_i32_1 = arith.constant 0 : i32
    %4 = arith.cmpi slt, %2, %c0_i32_1 : i32
    %c0_i32_2 = arith.constant 0 : i32
    %5 = arith.cmpi slt, %1, %c0_i32_2 : i32
    %6 = arith.xori %4, %5 : i1
    %7 = arith.andi %6, %3 : i1
    %8 = arith.addi %2, %1 : i32
    %9 = arith.select %7, %8, %2 : i32
    %c0_i32_3 = arith.constant 0 : i32
    %10 = arith.cmpi eq, %arg2, %c0_i32_3 : i32
    %11 = arith.extui %10 : i1 to i32
    %c0_i32_4 = arith.constant 0 : i32
    %12 = arith.cmpi ne, %11, %c0_i32_4 : i32
    scf.if %12 {
      %c512_i32_30 = arith.constant 512 : i32
      %52 = arith.muli %arg2, %c512_i32_30 : i32
      %53 = tpu.assume_multiple %52, 128 : i32
      %c16_i32_31 = arith.constant 16 : i32
      %54 = arith.muli %9, %c16_i32_31 : i32
      %c0_i32_32 = arith.constant 0 : i32
      %55 = tpu.memref_slice %arg3[%arg0, %c0_i32_32, %53] : memref<2x16x512xbf16, #tpu.memory_space<any>> -> memref<1x16x512xbf16, #tpu.memory_space<any>>
      %56 = tpu.memref_squeeze %55 : memref<1x16x512xbf16, #tpu.memory_space<any>> -> memref<16x512xbf16, #tpu.memory_space<any>>
      %c0_i32_33 = arith.constant 0 : i32
      %57 = tpu.memref_slice %arg9[%54, %c0_i32_33] : memref<32x512xbf16, #tpu.memory_space<vmem>> -> memref<16x512xbf16, #tpu.memory_space<vmem>>
      %58 = tpu.memref_slice %arg10[%9] : memref<2x!tpu.dma_semaphore, #tpu.memory_space<semaphore_mem>> -> memref<1x!tpu.dma_semaphore, #tpu.memory_space<semaphore_mem>>
      %59 = tpu.memref_squeeze %58 : memref<1x!tpu.dma_semaphore, #tpu.memory_space<semaphore_mem>> -> memref<!tpu.dma_semaphore, #tpu.memory_space<semaphore_mem>>
      tpu.enqueue_dma source(%56 : memref<16x512xbf16, #tpu.memory_space<any>>) target(%57 : memref<16x512xbf16, #tpu.memory_space<vmem>>) target_semaphore(%59 : memref<!tpu.dma_semaphore, #tpu.memory_space<semaphore_mem>>)
      %cst_34 = arith.constant 0.000000e+00 : f32
      %60 = vector.broadcast %cst_34 : f32 to vector<16x1xf32>
      %c0_35 = arith.constant 0 : index
      %c0_36 = arith.constant 0 : index
      %61 = vector.load %arg12[%c0_35, %c0_36] : memref<16x1xf32, #tpu.memory_space<vmem>>, vector<16x1xf32>
      tpu.vector_store %arg12[%c0_35, %c0_36], %60 {strides = array<i32>} : memref<16x1xf32, #tpu.memory_space<vmem>>, vector<16x1xf32>,
      %cst_37 = arith.constant 0.000000e+00 : f32
      %62 = vector.broadcast %cst_37 : f32 to vector<16x1xf32>
      %c0_38 = arith.constant 0 : index
      %c0_39 = arith.constant 0 : index
      %63 = vector.load %arg13[%c0_38, %c0_39] : memref<16x1xf32, #tpu.memory_space<vmem>>, vector<16x1xf32>
      tpu.vector_store %arg13[%c0_38, %c0_39], %62 {strides = array<i32>} : memref<16x1xf32, #tpu.memory_space<vmem>>, vector<16x1xf32>,
    } else {
    }
    %c1_i32_5 = arith.constant 1 : i32
    %13 = arith.addi %arg2, %c1_i32_5 : i32
    %c1_i32_6 = arith.constant 1 : i32
    %14 = arith.cmpi slt, %13, %c1_i32_6 : i32
    %15 = arith.extui %14 : i1 to i32
    %c0_i32_7 = arith.constant 0 : i32
    %16 = arith.cmpi ne, %15, %c0_i32_7 : i32
    scf.if %16 {
      %c1_i32_30 = arith.constant 1 : i32
      %52 = arith.addi %arg2, %c1_i32_30 : i32
      %c1_i32_31 = arith.constant 1 : i32
      %53 = arith.subi %c1_i32_31, %9 : i32
      %c512_i32_32 = arith.constant 512 : i32
      %54 = arith.muli %52, %c512_i32_32 : i32
      %55 = tpu.assume_multiple %54, 128 : i32
      %c16_i32_33 = arith.constant 16 : i32
      %56 = arith.muli %53, %c16_i32_33 : i32
      %c0_i32_34 = arith.constant 0 : i32
      %57 = tpu.memref_slice %arg3[%arg0, %c0_i32_34, %55] : memref<2x16x512xbf16, #tpu.memory_space<any>> -> memref<1x16x512xbf16, #tpu.memory_space<any>>
      %58 = tpu.memref_squeeze %57 : memref<1x16x512xbf16, #tpu.memory_space<any>> -> memref<16x512xbf16, #tpu.memory_space<any>>
      %c0_i32_35 = arith.constant 0 : i32
      %59 = tpu.memref_slice %arg9[%56, %c0_i32_35] : memref<32x512xbf16, #tpu.memory_space<vmem>> -> memref<16x512xbf16, #tpu.memory_space<vmem>>
      %60 = tpu.memref_slice %arg10[%53] : memref<2x!tpu.dma_semaphore, #tpu.memory_space<semaphore_mem>> -> memref<1x!tpu.dma_semaphore, #tpu.memory_space<semaphore_mem>>
      %61 = tpu.memref_squeeze %60 : memref<1x!tpu.dma_semaphore, #tpu.memory_space<semaphore_mem>> -> memref<!tpu.dma_semaphore, #tpu.memory_space<semaphore_mem>>
      tpu.enqueue_dma source(%58 : memref<16x512xbf16, #tpu.memory_space<any>>) target(%59 : memref<16x512xbf16, #tpu.memory_space<vmem>>) target_semaphore(%61 : memref<!tpu.dma_semaphore, #tpu.memory_space<semaphore_mem>>)
    } else {
    }
    %c512_i32 = arith.constant 512 : i32
    %17 = arith.muli %arg2, %c512_i32 : i32
    %18 = tpu.assume_multiple %17, 128 : i32
    %c16_i32 = arith.constant 16 : i32
    %19 = arith.muli %9, %c16_i32 : i32
    %c0_i32_8 = arith.constant 0 : i32
    %20 = tpu.memref_slice %arg3[%arg0, %c0_i32_8, %18] : memref<2x16x512xbf16, #tpu.memory_space<any>> -> memref<1x16x512xbf16, #tpu.memory_space<any>>
    %21 = tpu.memref_squeeze %20 : memref<1x16x512xbf16, #tpu.memory_space<any>> -> memref<16x512xbf16, #tpu.memory_space<any>>
    %c0_i32_9 = arith.constant 0 : i32
    %22 = tpu.memref_slice %arg9[%19, %c0_i32_9] : memref<32x512xbf16, #tpu.memory_space<vmem>> -> memref<16x512xbf16, #tpu.memory_space<vmem>>
    %23 = tpu.memref_slice %arg10[%9] : memref<2x!tpu.dma_semaphore, #tpu.memory_space<semaphore_mem>> -> memref<1x!tpu.dma_semaphore, #tpu.memory_space<semaphore_mem>>
    %24 = tpu.memref_squeeze %23 : memref<1x!tpu.dma_semaphore, #tpu.memory_space<semaphore_mem>> -> memref<!tpu.dma_semaphore, #tpu.memory_space<semaphore_mem>>
    tpu.wait_dma2 semaphore(%24 : memref<!tpu.dma_semaphore, #tpu.memory_space<semaphore_mem>>) src(%21 : memref<16x512xbf16, #tpu.memory_space<any>>) dst(%22 : memref<16x512xbf16, #tpu.memory_space<vmem>>)
    %c16_i32_10 = arith.constant 16 : i32
    %25 = arith.muli %9, %c16_i32_10 : i32
    %26 = tpu.assume_multiple %25, 16 : i32
    %c0 = arith.constant 0 : index
    %c0_11 = arith.constant 0 : index
    %27 = vector.load %arg4[%c0, %c0_11] : memref<16x16xbf16, #tpu.memory_space<vmem>>, vector<16x16xbf16>
    %28 = arith.index_cast %26 : i32 to index
    %c0_12 = arith.constant 0 : index
    %29 = vector.load %arg9[%28, %c0_12] : memref<32x512xbf16, #tpu.memory_space<vmem>>, vector<16x512xbf16>
    %cst = arith.constant dense<0.000000e+00> : vector<16x512xf32>
    %30 = tpu.matmul %27, %29, %cst {dimension_numbers = #tpu.dot_dimension_numbers<[1], [0], [0], [1], [0, 0, 1, 1], [], []>} : vector<16x16xbf16>, vector<16x512xbf16>, vector<16x512xf32> -> vector<16x512xf32>
    %31 = arith.truncf %30 : vector<16x512xf32> to vector<16x512xbf16>
    %c0_13 = arith.constant 0 : index
    %c0_14 = arith.constant 0 : index
    %c0_15 = arith.constant 0 : index
    %32 = vector.load %arg6[%c0_13, %c0_14, %c0_15] : memref<1x16x512xbf16, #tpu.memory_space<vmem>>, vector<1x16x512xbf16>
    %33 = vector.shape_cast %32 : vector<1x16x512xbf16> to vector<16x512xbf16>
    %34 = vector.shape_cast %31 : vector<16x512xbf16> to vector<1x16x512xbf16>
    tpu.vector_store %arg6[%c0_13, %c0_14, %c0_15], %34 {strides = array<i32>} : memref<1x16x512xbf16, #tpu.memory_space<vmem>>, vector<1x16x512xbf16>,
    %c0_16 = arith.constant 0 : index
    %c0_17 = arith.constant 0 : index
    %35 = vector.load %arg5[%c0_16, %c0_17] : memref<1x512xf32, #tpu.memory_space<vmem>>, vector<1x512xf32>
    %36 = vector.broadcast %35 : vector<1x512xf32> to vector<16x512xf32>
    %37 = arith.mulf %30, %36 : vector<16x512xf32>
    %c0_18 = arith.constant 0 : index
    %c0_19 = arith.constant 0 : index
    %38 = vector.load %arg12[%c0_18, %c0_19] : memref<16x1xf32, #tpu.memory_space<vmem>>, vector<16x1xf32>
    %cst_20 = arith.constant dense<0.000000e+00> : vector<16xf32>
    %39 = vector.multi_reduction <add>, %37, %cst_20 [1] : vector<16x512xf32> to vector<16xf32>
    %40 = vector.shape_cast %39 : vector<16xf32> to vector<16x1xf32>
    %41 = arith.addf %38, %40 : vector<16x1xf32>
    %c0_21 = arith.constant 0 : index
    %c0_22 = arith.constant 0 : index
    %42 = vector.load %arg12[%c0_21, %c0_22] : memref<16x1xf32, #tpu.memory_space<vmem>>, vector<16x1xf32>
    tpu.vector_store %arg12[%c0_21, %c0_22], %41 {strides = array<i32>} : memref<16x1xf32, #tpu.memory_space<vmem>>, vector<16x1xf32>,
    %c0_23 = arith.constant 0 : index
    %c0_24 = arith.constant 0 : index
    %43 = vector.load %arg13[%c0_23, %c0_24] : memref<16x1xf32, #tpu.memory_space<vmem>>, vector<16x1xf32>
    %44 = arith.mulf %37, %30 : vector<16x512xf32>
    %cst_25 = arith.constant dense<0.000000e+00> : vector<16xf32>
    %45 = vector.multi_reduction <add>, %44, %cst_25 [1] : vector<16x512xf32> to vector<16xf32>
    %46 = vector.shape_cast %45 : vector<16xf32> to vector<16x1xf32>
    %47 = arith.addf %43, %46 : vector<16x1xf32>
    %c0_26 = arith.constant 0 : index
    %c0_27 = arith.constant 0 : index
    %48 = vector.load %arg13[%c0_26, %c0_27] : memref<16x1xf32, #tpu.memory_space<vmem>>, vector<16x1xf32>
    tpu.vector_store %arg13[%c0_26, %c0_27], %47 {strides = array<i32>} : memref<16x1xf32, #tpu.memory_space<vmem>>, vector<16x1xf32>,
    %c0_i32_28 = arith.constant 0 : i32
    %49 = arith.cmpi eq, %arg2, %c0_i32_28 : i32
    %50 = arith.extui %49 : i1 to i32
    %c0_i32_29 = arith.constant 0 : i32
    %51 = arith.cmpi ne, %50, %c0_i32_29 : i32
    scf.if %51 {
      %c0_30 = arith.constant 0 : index
      %c0_31 = arith.constant 0 : index
      %52 = vector.load %arg12[%c0_30, %c0_31] : memref<16x1xf32, #tpu.memory_space<vmem>>, vector<16x1xf32>
      %cst_32 = arith.constant 0.001953125 : f32
      %53 = vector.broadcast %cst_32 : f32 to vector<16x1xf32>
      %54 = arith.mulf %52, %53 : vector<16x1xf32>
      %c0_33 = arith.constant 0 : index
      %c0_34 = arith.constant 0 : index
      %55 = vector.load %arg13[%c0_33, %c0_34] : memref<16x1xf32, #tpu.memory_space<vmem>>, vector<16x1xf32>
      %cst_35 = arith.constant 0.001953125 : f32
      %56 = vector.broadcast %cst_35 : f32 to vector<16x1xf32>
      %57 = arith.mulf %55, %56 : vector<16x1xf32>
      %58 = arith.mulf %54, %54 : vector<16x1xf32>
      %59 = arith.subf %57, %58 : vector<16x1xf32>
      %cst_36 = arith.constant 0.000000e+00 : f32
      %60 = vector.broadcast %cst_36 : f32 to vector<16x1xf32>
      %61 = arith.maximumf %59, %60 : vector<16x1xf32>
      %c0_37 = arith.constant 0 : index
      %c0_38 = arith.constant 0 : index
      %c0_39 = arith.constant 0 : index
      %62 = vector.load %arg7[%c0_37, %c0_38, %c0_39] : memref<1x16x1xf32, #tpu.memory_space<vmem>>, vector<1x16x1xf32>
      %63 = vector.shape_cast %62 : vector<1x16x1xf32> to vector<16x1xf32>
      %64 = vector.shape_cast %54 : vector<16x1xf32> to vector<1x16x1xf32>
      tpu.vector_store %arg7[%c0_37, %c0_38, %c0_39], %64 {strides = array<i32>} : memref<1x16x1xf32, #tpu.memory_space<vmem>>, vector<1x16x1xf32>,
      %cst_40 = arith.constant 9.99999974E-6 : f32
      %65 = vector.broadcast %cst_40 : f32 to vector<16x1xf32>
      %66 = arith.addf %61, %65 : vector<16x1xf32>
      %67 = math.rsqrt %66 : vector<16x1xf32>
      %c0_41 = arith.constant 0 : index
      %c0_42 = arith.constant 0 : index
      %c0_43 = arith.constant 0 : index
      %68 = vector.load %arg8[%c0_41, %c0_42, %c0_43] : memref<1x16x1xf32, #tpu.memory_space<vmem>>, vector<1x16x1xf32>
      %69 = vector.shape_cast %68 : vector<1x16x1xf32> to vector<16x1xf32>
      %70 = vector.shape_cast %67 : vector<16x1xf32> to vector<1x16x1xf32>
      tpu.vector_store %arg8[%c0_41, %c0_42, %c0_43], %70 {strides = array<i32>} : memref<1x16x1xf32, #tpu.memory_space<vmem>>, vector<1x16x1xf32>,
    } else {
    }
    return
  }
  func.func @transform_1(%arg0: i32, %arg1: i32, %arg2: i32) -> (i32, i32) {
    %c0_i32 = arith.constant 0 : i32
    %c0_i32_0 = arith.constant 0 : i32
    return %arg1, %c0_i32 : i32, i32
  }
  func.func @transform_2(%arg0: i32, %arg1: i32, %arg2: i32) -> (i32, i32) {
    %c0_i32 = arith.constant 0 : i32
    %c0_i32_0 = arith.constant 0 : i32
    return %c0_i32, %arg2 : i32, i32
  }
  func.func @transform_3(%arg0: i32, %arg1: i32, %arg2: i32) -> (i32, i32, i32) {
    %c0_i32 = arith.constant 0 : i32
    return %arg0, %arg1, %arg2 : i32, i32, i32
  }
  func.func @transform_4(%arg0: i32, %arg1: i32, %arg2: i32) -> (i32, i32, i32) {
    %c0_i32 = arith.constant 0 : i32
    %c0_i32_0 = arith.constant 0 : i32
    return %arg0, %arg1, %c0_i32 : i32, i32, i32
  }
  func.func @transform_5(%arg0: i32, %arg1: i32, %arg2: i32) -> (i32, i32, i32) {
    %c0_i32 = arith.constant 0 : i32
    %c0_i32_0 = arith.constant 0 : i32
    return %arg0, %arg1, %c0_i32 : i32, i32, i32
  }
}

module attributes {stable_mosaic.version = 11 : i64} {
  func.func @_norm_act_kernel(%arg0: i32, %arg1: i32, %arg2: memref<1x16x512xbf16, #tpu.memory_space<vmem>>, %arg3: memref<1x16x1xf32, #tpu.memory_space<vmem>>, %arg4: memref<1x16x1xf32, #tpu.memory_space<vmem>>, %arg5: memref<1x8x512xf32, #tpu.memory_space<vmem>>) attributes {dimension_semantics = [#tpu.dimension_semantics<parallel>, #tpu.dimension_semantics<parallel>], iteration_bounds = array<i64: 2, 1>, scalar_prefetch = 0 : i64, scratch_operands = 0 : i64, tpu.core_type = #tpu.core_type<tc>, window_params = [{transform_indices = @transform_0, window_bounds = array<i64: 1, 16, 512>}, {transform_indices = @transform_1, window_bounds = array<i64: 1, 16, 1>}, {transform_indices = @transform_2, window_bounds = array<i64: 1, 16, 1>}, {transform_indices = @transform_3, window_bounds = array<i64: 1, 8, 512>}]} {
    %c0 = arith.constant 0 : index
    %c0_0 = arith.constant 0 : index
    %c0_1 = arith.constant 0 : index
    %0 = vector.load %arg2[%c0, %c0_0, %c0_1] : memref<1x16x512xbf16, #tpu.memory_space<vmem>>, vector<1x16x512xbf16>
    %1 = vector.shape_cast %0 : vector<1x16x512xbf16> to vector<16x512xbf16>
    %2 = arith.extf %1 : vector<16x512xbf16> to vector<16x512xf32>
    %c0_2 = arith.constant 0 : index
    %c0_3 = arith.constant 0 : index
    %c0_4 = arith.constant 0 : index
    %3 = vector.load %arg3[%c0_2, %c0_3, %c0_4] : memref<1x16x1xf32, #tpu.memory_space<vmem>>, vector<1x16x1xf32>
    %4 = vector.shape_cast %3 : vector<1x16x1xf32> to vector<16x1xf32>
    %5 = vector.broadcast %4 : vector<16x1xf32> to vector<16x512xf32>
    %6 = arith.subf %2, %5 : vector<16x512xf32>
    %c0_5 = arith.constant 0 : index
    %c0_6 = arith.constant 0 : index
    %c0_7 = arith.constant 0 : index
    %7 = vector.load %arg4[%c0_5, %c0_6, %c0_7] : memref<1x16x1xf32, #tpu.memory_space<vmem>>, vector<1x16x1xf32>
    %8 = vector.shape_cast %7 : vector<1x16x1xf32> to vector<16x1xf32>
    %9 = vector.broadcast %8 : vector<16x1xf32> to vector<16x512xf32>
    %10 = arith.mulf %6, %9 : vector<16x512xf32>
    %cst = arith.constant 0.000000e+00 : f32
    %11 = vector.broadcast %cst : f32 to vector<16x512xf32>
    %12 = arith.cmpf oge, %10, %11 : vector<16x512xf32>
    %cst_8 = arith.constant 0.00999999977 : f32
    %13 = vector.broadcast %cst_8 : f32 to vector<16x512xf32>
    %14 = arith.mulf %13, %10 : vector<16x512xf32>
    %15 = arith.select %12, %10, %14 : vector<16x512xi1>, vector<16x512xf32>
    %16 = vector.extract_strided_slice %15 {offsets = [0, 0], sizes = [8, 512], strides = [1, 1]} : vector<16x512xf32> to vector<8x512xf32>
    %c0_9 = arith.constant 0 : index
    %c0_10 = arith.constant 0 : index
    %c0_11 = arith.constant 0 : index
    %17 = vector.load %arg5[%c0_9, %c0_10, %c0_11] : memref<1x8x512xf32, #tpu.memory_space<vmem>>, vector<1x8x512xf32>
    %18 = vector.shape_cast %17 : vector<1x8x512xf32> to vector<8x512xf32>
    %19 = vector.shape_cast %16 : vector<8x512xf32> to vector<1x8x512xf32>
    tpu.vector_store %arg5[%c0_9, %c0_10, %c0_11], %19 {strides = array<i32>} : memref<1x8x512xf32, #tpu.memory_space<vmem>>, vector<1x8x512xf32>,
    return
  }
  func.func @transform_0(%arg0: i32, %arg1: i32) -> (i32, i32, i32) {
    %c0_i32 = arith.constant 0 : i32
    %c0_i32_0 = arith.constant 0 : i32
    return %arg0, %c0_i32, %arg1 : i32, i32, i32
  }
  func.func @transform_1(%arg0: i32, %arg1: i32) -> (i32, i32, i32) {
    %c0_i32 = arith.constant 0 : i32
    %c0_i32_0 = arith.constant 0 : i32
    %c0_i32_1 = arith.constant 0 : i32
    return %arg0, %c0_i32, %c0_i32_0 : i32, i32, i32
  }
  func.func @transform_2(%arg0: i32, %arg1: i32) -> (i32, i32, i32) {
    %c0_i32 = arith.constant 0 : i32
    %c0_i32_0 = arith.constant 0 : i32
    %c0_i32_1 = arith.constant 0 : i32
    return %arg0, %c0_i32, %c0_i32_0 : i32, i32, i32
  }
  func.func @transform_3(%arg0: i32, %arg1: i32) -> (i32, i32, i32) {
    %c0_i32 = arith.constant 0 : i32
    %c0_i32_0 = arith.constant 0 : i32
    return %arg0, %c0_i32, %arg1 : i32, i32, i32
  }
}

</mosaic_0001>

<llo_original>
// kernel: conv3d_bn_forward.3
$region0: #{conv3d_bn_forward.3}
  #allocation0 [shape = 'u32[]', space=smem, size = 0x4, offset = 0x4, fixed_abs, tag = 'smem constant byte address 0x4 - core index']
  #allocation1 [shape = 'u32[144,128]{1,0:T(1,128)}', space=vmem, size = 0x12000, scoped, tag = 'internal scratch']
  %s0 = inlined_call_operand.vmem [shape: bf16[2,16,512], index: 0, kind: input, shape index: {}]
  %s1 = inlined_call_operand.vmem [shape: f32[2,16,1], index: 1, kind: input, shape index: {}]
  %s2 = inlined_call_operand.vmem [shape: f32[2,16,1], index: 2, kind: input, shape index: {}]
  %s3 = inlined_call_operand.vmem [shape: f32[2,8,512], index: 3, kind: output, shape index: {}]
  %s4 = sld [smem:[#allocation0]]
  $region45: #{conv3d_bn_forward.3} parent=0
    _
  %s6 = ssub.s32 1, %s4
  %s7 = scalar_select 0, %s6, %s4
  loop: start=0, step=1, limit=4
  $region2: #{conv3d_bn_forward.3} parent=0 // loop_pre_header
    _
  $region3: #{conv3d_bn_forward.3} parent=0 // loop_header
    %s9 = sphi 0, %s13
    %p10 = scmp.ge.s32.totalorder %s9, 4
    %s16 = sphi 0, %s28
    %s17 = sphi 0, %s24
    %s18 = sphi 0, %s16
    %s19 = sphi 0, %s17
    %s20 = sphi 0, %s18
    %s21 = sphi 0, %s19
    %s33 = sphi 0, %s35
    %s36 = sphi 0, %s33
    %s37 = sphi 0, %s36
    %s53 = sphi 0, %s37
    %s59 = sphi 0, %s61
    %s62 = sphi 0, %s59
    %s63 = sphi 0, %s62
    %s79 = sphi 0, %s63
    %s85 = sphi 0, %s87
    %s88 = sphi 0, %s85
    %s89 = sphi 0, %s88
    %s105 = sphi 0, %s89
    %s113 = sphi 0, %s115
    %s116 = sphi 0, %s113
    %s117 = sphi 0, %s116
    %s133 = sphi 0, %s117
  $region4: #{conv3d_bn_forward.3} parent=0 // loop_header_branch
    %12 = sbr.rel (%p10) target = $region8
  $region5: #{conv3d_bn_forward.3} parent=0 // loop_body
    %s14 = ssub.s32 %s9, 1
    %s15 = ssub.s32 %s9, 2
    %s22 = sadd.s32 1, %s17
    %p23 = scmp.ge.s32.totalorder %s22, 1
    %s24 = scalar_select %p23, 0, %s22
    %s25 = sadd.s32 1, %s16
    %s26 = scalar_select %p23, %s25, %s16
    %p27 = scmp.ge.s32.totalorder %s26, 2
    %s28 = scalar_select %p27, 0, %s26
    %s29 = ssub.s32 %s16, %s28
    %s30 = ssub.s32 %s17, %s24
    %s31 = sor.u32 %s29, %s30
    %p32 = scmp.eq.s32.totalorder %s31, 0
    %s34 = sadd.s32 %s33, 1
    %s35 = scalar_select %p32, %s33, %s34
    %p38 = pneg %p32
    %p39 = scmp.eq.s32.totalorder %s9, 1
    %p40 = por %p38, %p39
    %p41 = scmp.ne.s32.totalorder %s33, %s36
    %p42 = scmp.eq.s32.totalorder %s9, 0
    %p43 = por %p41, %p42
    %p44 = scmp.ne.s32.totalorder %s33, %s36
    %p45 = scmp.eq.s32.totalorder %s14, 1
    %p46 = por %p44, %p45
    %p47 = scmp.ne.s32.totalorder %s36, %s37
    %p48 = scmp.eq.s32.totalorder %s14, 0
    %p49 = por %p47, %p48
    %p50 = scmp.ne.s32.totalorder %s36, %s37
    %p51 = scmp.eq.s32.totalorder %s15, 1
    %p52 = por %p50, %p51
    %p54 = scmp.ne.s32.totalorder %s37, %s53
    %p55 = scmp.eq.s32.totalorder %s15, 0
    %p56 = por %p54, %p55
    %s57 = ssub.s32 %s16, %s28
    %p58 = scmp.eq.s32.totalorder %s57, 0
    %s60 = sadd.s32 %s59, 1
    %s61 = scalar_select %p58, %s59, %s60
    %p64 = pneg %p58
    %p65 = scmp.eq.s32.totalorder %s9, 1
    %p66 = por %p64, %p65
    %p67 = scmp.ne.s32.totalorder %s59, %s62
    %p68 = scmp.eq.s32.totalorder %s9, 0
    %p69 = por %p67, %p68
    %p70 = scmp.ne.s32.totalorder %s59, %s62
    %p71 = scmp.eq.s32.totalorder %s14, 1
    %p72 = por %p70, %p71
    %p73 = scmp.ne.s32.totalorder %s62, %s63
    %p74 = scmp.eq.s32.totalorder %s14, 0
    %p75 = por %p73, %p74
    %p76 = scmp.ne.s32.totalorder %s62, %s63
    %p77 = scmp.eq.s32.totalorder %s15, 1
    %p78 = por %p76, %p77
    %p80 = scmp.ne.s32.totalorder %s63, %s79
    %p81 = scmp.eq.s32.totalorder %s15, 0
    %p82 = por %p80, %p81
    %s83 = ssub.s32 %s16, %s28
    %p84 = scmp.eq.s32.totalorder %s83, 0
    %s86 = sadd.s32 %s85, 1
    %s87 = scalar_select %p84, %s85, %s86
    %p90 = pneg %p84
    %p91 = scmp.eq.s32.totalorder %s9, 1
    %p92 = por %p90, %p91
    %p93 = scmp.ne.s32.totalorder %s85, %s88
    %p94 = scmp.eq.s32.totalorder %s9, 0
    %p95 = por %p93, %p94
    %p96 = scmp.ne.s32.totalorder %s85, %s88
    %p97 = scmp.eq.s32.totalorder %s14, 1
    %p98 = por %p96, %p97
    %p99 = scmp.ne.s32.totalorder %s88, %s89
    %p100 = scmp.eq.s32.totalorder %s14, 0
    %p101 = por %p99, %p100
    %p102 = scmp.ne.s32.totalorder %s88, %s89
    %p103 = scmp.eq.s32.totalorder %s15, 1
    %p104 = por %p102, %p103
    %p106 = scmp.ne.s32.totalorder %s89, %s105
    %p107 = scmp.eq.s32.totalorder %s15, 0
    %p108 = por %p106, %p107
    %s109 = ssub.s32 %s16, %s28
    %s110 = ssub.s32 %s17, %s24
    %s111 = sor.u32 %s109, %s110
    %p112 = scmp.eq.s32.totalorder %s111, 0
    %s114 = sadd.s32 %s113, 1
    %s115 = scalar_select %p112, %s113, %s114
    %p118 = pneg %p112
    %p119 = scmp.eq.s32.totalorder %s9, 1
    %p120 = por %p118, %p119
    %p121 = scmp.ne.s32.totalorder %s113, %s116
    %p122 = scmp.eq.s32.totalorder %s9, 0
    %p123 = por %p121, %p122
    %p124 = scmp.ne.s32.totalorder %s113, %s116
    %p125 = scmp.eq.s32.totalorder %s14, 1
    %p126 = por %p124, %p125
    %p127 = scmp.ne.s32.totalorder %s116, %s117
    %p128 = scmp.eq.s32.totalorder %s14, 0
    %p129 = por %p127, %p128
    %p130 = scmp.ne.s32.totalorder %s116, %s117
    %p131 = scmp.eq.s32.totalorder %s15, 1
    %p132 = por %p130, %p131
    %p134 = scmp.ne.s32.totalorder %s117, %s133
    %p135 = scmp.eq.s32.totalorder %s15, 0
    %p136 = por %p134, %p135
    %p137 = scmp.le.s32.totalorder 1, %s9
    %p138 = scmp.lt.s32.totalorder %s9, 3
    %p139 = pnand %p137, %p138
    %p140 = pneg %p139
    // Predicated region
    $region9: #{conv3d_bn_forward.3} parent=5 // pred_check
      _
    $region10: #{conv3d_bn_forward.3} parent=5 // pred_check_branch
      %142 = sbr.rel (%p139) target = $region12
    $region11: #{conv3d_bn_forward.3} parent=5 // pred_region
      %s143 = ssub.s32 %s9, 1
    $region12: #{conv3d_bn_forward.3} parent=5 // pred_fallthru
      _
    %p144 = scmp.lt.s32.totalorder %s9, 2
    // Predicated region
    $region13: #{conv3d_bn_forward.3} parent=5 // pred_check
      %p145 = pneg %p144
    $region14: #{conv3d_bn_forward.3} parent=5 // pred_check_branch
      %147 = sbr.rel (%p145) target = $region16
    $region15: #{conv3d_bn_forward.3} parent=5 // pred_region
      // Predicated region
      $region17: #{conv3d_bn_forward.3} parent=15 // pred_check
        %p148 = pneg %p43
      $region18: #{conv3d_bn_forward.3} parent=15 // pred_check_branch
        %150 = sbr.rel (%p148) target = $region20
      $region19: #{conv3d_bn_forward.3} parent=15 // pred_region
        %s151 = smul.u32 4, %s17
        %p152 = scmp.lt.s32.totalorder %s16, 1
        %s153 = scalar_select %p152, %s16, 1
        %p154 = scmp.lt.s32.totalorder %s151, 3
        %s155 = scalar_select %p154, %s151, 3
        %s156 = smul.addr %s153, 8
        %s157 = sadd.s32 %s155, %s156
        %s158 = smul.addr %s157, 4
        %s159 = scalar_lea.vmem %s0, %s158
        %s160 = smul.u32 4, %s17
      $region20: #{conv3d_bn_forward.3} parent=15 // pred_fallthru
        _
      // Predicated region
      $region21: #{conv3d_bn_forward.3} parent=15 // pred_check
        %p161 = pneg %p69
      $region22: #{conv3d_bn_forward.3} parent=15 // pred_check_branch
        %163 = sbr.rel (%p161) target = $region24
      $region23: #{conv3d_bn_forward.3} parent=15 // pred_region
        %p164 = scmp.lt.s32.totalorder %s16, 1
        %s165 = scalar_select %p164, %s16, 1
        %s166 = smul.addr %s165, 2
        %s167 = smul.addr %s166, 8
        %s168 = scalar_lea.vmem %s1, %s167
      $region24: #{conv3d_bn_forward.3} parent=15 // pred_fallthru
        _
      // Predicated region
      $region25: #{conv3d_bn_forward.3} parent=15 // pred_check
        %p169 = pneg %p95
      $region26: #{conv3d_bn_forward.3} parent=15 // pred_check_branch
        %171 = sbr.rel (%p169) target = $region28
      $region27: #{conv3d_bn_forward.3} parent=15 // pred_region
        %p172 = scmp.lt.s32.totalorder %s16, 1
        %s173 = scalar_select %p172, %s16, 1
        %s174 = smul.addr %s173, 2
        %s175 = smul.addr %s174, 8
        %s176 = scalar_lea.vmem %s2, %s175
      $region28: #{conv3d_bn_forward.3} parent=15 // pred_fallthru
        _
    $region16: #{conv3d_bn_forward.3} parent=5 // pred_fallthru
      _
    %p177 = scmp.le.s32.totalorder 1, %s9
    %p178 = scmp.lt.s32.totalorder %s9, 3
    %p179 = pnand %p177, %p178
    %p180 = pneg %p179
    // Predicated region
    $region29: #{conv3d_bn_forward.3} parent=5 // pred_check
      _
    $region30: #{conv3d_bn_forward.3} parent=5 // pred_check_branch
      %182 = sbr.rel (%p179) target = $region32
    $region31: #{conv3d_bn_forward.3} parent=5 // pred_region
      %s183 = ssub.s32 %s9, 1
      %s184 = smul.u32 4, %s19
      %p185 = scmp.lt.s32.totalorder %s18, 1
      %s186 = scalar_select %p185, %s18, 1
      %p187 = scmp.lt.s32.totalorder %s184, 3
      %s188 = scalar_select %p187, %s184, 3
      %s189 = smul.addr %s186, 8
      %s190 = sadd.s32 %s188, %s189
      %s191 = smul.addr %s190, 4
      %s192 = scalar_lea.vmem %s0, %s191
      %p193 = pneg %p49
      %p194 = pneg %p46
      %p195 = scmp.lt.s32.totalorder %s18, 1
      %s196 = scalar_select %p195, %s18, 1
      %s197 = smul.addr %s196, 2
      %s198 = smul.addr %s197, 8
      %s199 = scalar_lea.vmem %s1, %s198
      %p200 = pneg %p75
      %p201 = pneg %p72
      %p202 = scmp.lt.s32.totalorder %s18, 1
      %s203 = scalar_select %p202, %s18, 1
      %s204 = smul.addr %s203, 2
      %s205 = smul.addr %s204, 8
      %s206 = scalar_lea.vmem %s2, %s205
      %p207 = pneg %p101
      %p208 = pneg %p98
      %p209 = pneg %p129
      %p210 = pneg %p126
      %s211 = smul.u32 4, %s19
      %p212 = scmp.lt.s32.totalorder %s18, 1
      %s213 = scalar_select %p212, %s18, 1
      %p214 = scmp.lt.s32.totalorder %s211, 3
      %s215 = scalar_select %p214, %s211, 3
      %s216 = smul.addr %s213, 4
      %s217 = sadd.s32 %s215, %s216
      %s218 = smul.addr %s217, 8
      %s219 = scalar_lea.vmem %s3, %s218
      %s220 = smul.u32 4, %s19
      %p221 = scmp.lt.s32.totalorder %s18, 1
      %s222 = scalar_select %p221, %s18, 1
      %p223 = scmp.lt.s32.totalorder %s220, 3
      %s224 = scalar_select %p223, %s220, 3
      %s225 = smul.addr %s222, 8
      %s226 = sadd.s32 %s224, %s225
      %s227 = smul.addr %s226, 4
      %s228 = scalar_lea.vmem %s0, %s227
      %s229 = smul.u32 4, %s19
      %p230 = scmp.lt.s32.totalorder %s18, 1
      %s231 = scalar_select %p230, %s18, 1
      %s232 = smul.addr %s231, 2
      %s233 = smul.addr %s232, 8
      %s234 = scalar_lea.vmem %s1, %s233
      %p235 = scmp.lt.s32.totalorder %s18, 1
      %s236 = scalar_select %p235, %s18, 1
      %s237 = smul.addr %s236, 2
      %s238 = smul.addr %s237, 8
      %s239 = scalar_lea.vmem %s2, %s238
      %s240 = smul.u32 4, %s19
      %p241 = scmp.lt.s32.totalorder %s18, 1
      %s242 = scalar_select %p241, %s18, 1
      %p243 = scmp.lt.s32.totalorder %s240, 3
      %s244 = scalar_select %p243, %s240, 3
      %s245 = smul.addr %s242, 4
      %s246 = sadd.s32 %s244, %s245
      %s247 = smul.addr %s246, 8
      %s248 = scalar_lea.vmem %s3, %s247
      %s249 = smul.u32 4, %s19
      %v250 = vld [vmem:[%s228] sm:$0xff]
      %v251 = vld [vmem:[%s228 + $0x8] sm:$0xff]
      %v252 = vunpack.c.l.bf16 %v250
      %v253 = vunpack.c.h.bf16 %v250
      %v254 = vunpack.c.l.bf16 %v251
      %v255 = vunpack.c.h.bf16 %v251
      %v256 = vld [vmem:[%s234] sm:$0xff]
      %258 = vset.pattern.permute.xlu0 0
      %259 = vperm.xlu0 %258, %v256
      %v260 = vpop.permute.xlu0 %259
      %v262 = vsub.f32 %v252, %v260
      %v263 = vsub.f32 %v253, %v260
      %v264 = vsub.f32 %v254, %v260
      %v265 = vsub.f32 %v255, %v260
      %v266 = vld [vmem:[%s239] sm:$0xff]
      %268 = vset.pattern.permute.xlu0 0
      %269 = vperm.xlu0 %268, %v266
      %v270 = vpop.permute.xlu0 %269
      %v272 = vmul.f32 %v262, %v270
      %v273 = vmul.f32 %v263, %v270
      %v274 = vmul.f32 %v264, %v270
      %v275 = vmul.f32 %v265, %v270
      %vm276 = vcmp.ge.f32.partialorder %v272, 0.0
      %vm277 = vcmp.ge.f32.partialorder %v273, 0.0
      %vm278 = vcmp.ge.f32.partialorder %v274, 0.0
      %vm279 = vcmp.ge.f32.partialorder %v275, 0.0
      %v280 = vmul.f32 %v272, 0.01
      %v281 = vmul.f32 %v273, 0.01
      %v282 = vmul.f32 %v274, 0.01
      %v283 = vmul.f32 %v275, 0.01
      %v284 = vsel %vm276, %v272, %v280
      %v285 = vsel %vm277, %v273, %v281
      %v286 = vsel %vm278, %v274, %v282
      %v287 = vsel %vm279, %v275, %v283
      %288 = vst [vmem:[%s248] sm:$0xff] %v284
      %289 = vst [vmem:[%s248 + $0x8] sm:$0xff] %v285
      %290 = vst [vmem:[%s248 + $0x10] sm:$0xff] %v286
      %291 = vst [vmem:[%s248 + $0x18] sm:$0xff] %v287
      %s292 = smul.u32 4, %s19
      %p293 = scmp.lt.s32.totalorder %s18, 1
      %s294 = scalar_select %p293, %s18, 1
      %p295 = scmp.lt.s32.totalorder %s292, 3
      %s296 = scalar_select %p295, %s292, 3
      %s297 = smul.addr %s294, 4
      %s298 = sadd.s32 %s296, %s297
      %s299 = smul.addr %s298, 8
      %s300 = scalar_lea.vmem %s3, %s299
      // Predicated region
      $region33: #{conv3d_bn_forward.3} parent=31 // pred_check
        %p301 = pneg %p126
      $region34: #{conv3d_bn_forward.3} parent=31 // pred_check_branch
        %303 = sbr.rel (%p301) target = $region36
      $region35: #{conv3d_bn_forward.3} parent=31 // pred_region
        %s304 = smul.u32 4, %s19
      $region36: #{conv3d_bn_forward.3} parent=31 // pred_fallthru
        _
    $region32: #{conv3d_bn_forward.3} parent=5 // pred_fallthru
      _
    %p305 = scmp.le.s32.totalorder 2, %s9
    // Predicated region
    $region37: #{conv3d_bn_forward.3} parent=5 // pred_check
      %p306 = pneg %p305
    $region38: #{conv3d_bn_forward.3} parent=5 // pred_check_branch
      %308 = sbr.rel (%p306) target = $region40
    $region39: #{conv3d_bn_forward.3} parent=5 // pred_region
      %s309 = ssub.s32 %s9, 2
      // Predicated region
      $region41: #{conv3d_bn_forward.3} parent=39 // pred_check
        %p310 = pneg %p132
      $region42: #{conv3d_bn_forward.3} parent=39 // pred_check_branch
        %312 = sbr.rel (%p310) target = $region44
      $region43: #{conv3d_bn_forward.3} parent=39 // pred_region
        %s313 = smul.u32 4, %s21
        %p314 = scmp.lt.s32.totalorder %s20, 1
        %s315 = scalar_select %p314, %s20, 1
        %p316 = scmp.lt.s32.totalorder %s313, 3
        %s317 = scalar_select %p316, %s313, 3
        %s318 = smul.addr %s315, 4
        %s319 = sadd.s32 %s317, %s318
        %s320 = smul.addr %s319, 8
        %s321 = scalar_lea.vmem %s3, %s320
      $region44: #{conv3d_bn_forward.3} parent=39 // pred_fallthru
        _
    $region40: #{conv3d_bn_forward.3} parent=5 // pred_fallthru
      _
  $region6: #{conv3d_bn_forward.3} parent=0 // loop_footer
    %s13 = sadd.s32 1, %s9
  $region7: #{conv3d_bn_forward.3} parent=0 // loop_footer_branch
    %8 = sbr.rel target = $region3
  $region8: #{conv3d_bn_forward.3} parent=0 // loop_exit
    _

// kernel: conv3d_bn_forward.2
$region0: #{conv3d_bn_forward.2}
  #allocation0 [shape = 'u32[]', space=smem, size = 0x4, offset = 0x4, fixed_abs, tag = 'smem constant byte address 0x4 - core index']
  #allocation1 [shape = 'u32[144,128]{1,0:T(1,128)}', space=vmem, size = 0x12000, scoped, tag = 'internal scratch']
  #allocation2 [shape = 'bf16[32,512]{1,0:T(16,128)(2,1)}', space=vmem, size = 0x8000, scoped, tag = 'scratch operand']
  #allocation3 [shape = 's32[2]{0}', space=sflag, size = 0x8, scoped, tag = 'scratch operand']
  #allocation4 [shape = 'bf16[16,512]{1,0:T(16,128)(2,1)}', space=vmem, size = 0x4000, scoped, tag = 'scratch operand']
  #allocation5 [shape = 'f32[16,1]{1,0:T(8,128)}', space=vmem, size = 0x2000, scoped, tag = 'scratch operand']
  #allocation6 [shape = 'f32[16,1]{1,0:T(8,128)}', space=vmem, size = 0x2000, scoped, tag = 'scratch operand']
  #allocation7 [shape = 's32[]', space=sflag, size = 0x4, offset = 0, fixed_abs, tag = 'sflag constant byte address 0x0 - dummy sync flag']
  #allocation8 [shape = 's32[]', space=sflag, size = 0x4, offset = 0, fixed_abs, tag = 'sflag constant byte address 0x0 - dummy sync flag']
  %s0 = inlined_call_operand.vmem [shape: bf16[2,16,512], index: 0, kind: input, shape index: {}]
  %s1 = inlined_call_operand.vmem [shape: bf16[16,16], index: 1, kind: input, shape index: {}]
  %s2 = inlined_call_operand.vmem [shape: f32[1,512], index: 2, kind: input, shape index: {}]
  %s3 = inlined_call_operand.vmem [shape: bf16[2,16,512], index: 3, kind: output, shape index: {0}]
  %s4 = inlined_call_operand.vmem [shape: f32[2,16,1], index: 4, kind: output, shape index: {1}]
  %s5 = inlined_call_operand.vmem [shape: f32[2,16,1], index: 5, kind: output, shape index: {2}]
  %6 = xla_tuple %s3, %s4, %s5
  %s7 = sld [smem:[#allocation0]]
  $region143: #{conv3d_bn_forward.2} parent=0
    _
  %s9 = ssub.s32 1, %s7
  %s10 = scalar_select 0, %s9, %s7
  loop: start=0, step=1, limit=4
  $region2: #{conv3d_bn_forward.2} parent=0 // loop_pre_header
    _
  $region3: #{conv3d_bn_forward.2} parent=0 // loop_header
    %s12 = sphi 0, %s16
    %p13 = scmp.ge.s32.totalorder %s12, 4
    %s19 = sphi 0, %s38
    %s20 = sphi 0, %s34
    %s21 = sphi 0, %s30
    %s22 = sphi 0, %s19
    %s23 = sphi 0, %s20
    %s24 = sphi 0, %s21
    %s25 = sphi 0, %s22
    %s26 = sphi 0, %s23
    %s27 = sphi 0, %s24
    %s41 = sphi 0, %s43
    %s44 = sphi 0, %s41
    %s45 = sphi 0, %s44
    %s61 = sphi 0, %s45
    %s67 = sphi 0, %s69
    %s70 = sphi 0, %s67
    %s71 = sphi 0, %s70
    %s87 = sphi 0, %s71
    %s97 = sphi 0, %s99
    %s100 = sphi 0, %s97
    %s101 = sphi 0, %s100
    %s117 = sphi 0, %s101
    %s125 = sphi 0, %s127
    %s128 = sphi 0, %s125
    %s129 = sphi 0, %s128
    %s145 = sphi 0, %s129
    %s153 = sphi 0, %s155
    %s156 = sphi 0, %s153
    %s157 = sphi 0, %s156
    %s173 = sphi 0, %s157
  $region4: #{conv3d_bn_forward.2} parent=0 // loop_header_branch
    %15 = sbr.rel (%p13) target = $region8
  $region5: #{conv3d_bn_forward.2} parent=0 // loop_body
    %s17 = ssub.s32 %s12, 1
    %s18 = ssub.s32 %s12, 2
    %s28 = sadd.s32 1, %s21
    %p29 = scmp.ge.s32.totalorder %s28, 1
    %s30 = scalar_select %p29, 0, %s28
    %s31 = sadd.s32 1, %s20
    %s32 = scalar_select %p29, %s31, %s20
    %p33 = scmp.ge.s32.totalorder %s32, 1
    %s34 = scalar_select %p33, 0, %s32
    %s35 = sadd.s32 1, %s19
    %s36 = scalar_select %p33, %s35, %s19
    %p37 = scmp.ge.s32.totalorder %s36, 2
    %s38 = scalar_select %p37, 0, %s36
    %s39 = ssub.s32 %s20, %s34
    %p40 = scmp.eq.s32.totalorder %s39, 0
    %s42 = sadd.s32 %s41, 1
    %s43 = scalar_select %p40, %s41, %s42
    %p46 = pneg %p40
    %p47 = scmp.eq.s32.totalorder %s12, 1
    %p48 = por %p46, %p47
    %p49 = scmp.ne.s32.totalorder %s41, %s44
    %p50 = scmp.eq.s32.totalorder %s12, 0
    %p51 = por %p49, %p50
    %p52 = scmp.ne.s32.totalorder %s41, %s44
    %p53 = scmp.eq.s32.totalorder %s17, 1
    %p54 = por %p52, %p53
    %p55 = scmp.ne.s32.totalorder %s44, %s45
    %p56 = scmp.eq.s32.totalorder %s17, 0
    %p57 = por %p55, %p56
    %p58 = scmp.ne.s32.totalorder %s44, %s45
    %p59 = scmp.eq.s32.totalorder %s18, 1
    %p60 = por %p58, %p59
    %p62 = scmp.ne.s32.totalorder %s45, %s61
    %p63 = scmp.eq.s32.totalorder %s18, 0
    %p64 = por %p62, %p63
    %s65 = ssub.s32 %s21, %s30
    %p66 = scmp.eq.s32.totalorder %s65, 0
    %s68 = sadd.s32 %s67, 1
    %s69 = scalar_select %p66, %s67, %s68
    %p72 = pneg %p66
    %p73 = scmp.eq.s32.totalorder %s12, 1
    %p74 = por %p72, %p73
    %p75 = scmp.ne.s32.totalorder %s67, %s70
    %p76 = scmp.eq.s32.totalorder %s12, 0
    %p77 = por %p75, %p76
    %p78 = scmp.ne.s32.totalorder %s67, %s70
    %p79 = scmp.eq.s32.totalorder %s17, 1
    %p80 = por %p78, %p79
    %p81 = scmp.ne.s32.totalorder %s70, %s71
    %p82 = scmp.eq.s32.totalorder %s17, 0
    %p83 = por %p81, %p82
    %p84 = scmp.ne.s32.totalorder %s70, %s71
    %p85 = scmp.eq.s32.totalorder %s18, 1
    %p86 = por %p84, %p85
    %p88 = scmp.ne.s32.totalorder %s71, %s87
    %p89 = scmp.eq.s32.totalorder %s18, 0
    %p90 = por %p88, %p89
    %s91 = ssub.s32 %s19, %s38
    %s92 = ssub.s32 %s20, %s34
    %s93 = sor.u32 %s91, %s92
    %s94 = ssub.s32 %s21, %s30
    %s95 = sor.u32 %s93, %s94
    %p96 = scmp.eq.s32.totalorder %s95, 0
    %s98 = sadd.s32 %s97, 1
    %s99 = scalar_select %p96, %s97, %s98
    %p102 = pneg %p96
    %p103 = scmp.eq.s32.totalorder %s12, 1
    %p104 = por %p102, %p103
    %p105 = scmp.ne.s32.totalorder %s97, %s100
    %p106 = scmp.eq.s32.totalorder %s12, 0
    %p107 = por %p105, %p106
    %p108 = scmp.ne.s32.totalorder %s97, %s100
    %p109 = scmp.eq.s32.totalorder %s17, 1
    %p110 = por %p108, %p109
    %p111 = scmp.ne.s32.totalorder %s100, %s101
    %p112 = scmp.eq.s32.totalorder %s17, 0
    %p113 = por %p111, %p112
    %p114 = scmp.ne.s32.totalorder %s100, %s101
    %p115 = scmp.eq.s32.totalorder %s18, 1
    %p116 = por %p114, %p115
    %p118 = scmp.ne.s32.totalorder %s101, %s117
    %p119 = scmp.eq.s32.totalorder %s18, 0
    %p120 = por %p118, %p119
    %s121 = ssub.s32 %s19, %s38
    %s122 = ssub.s32 %s20, %s34
    %s123 = sor.u32 %s121, %s122
    %p124 = scmp.eq.s32.totalorder %s123, 0
    %s126 = sadd.s32 %s125, 1
    %s127 = scalar_select %p124, %s125, %s126
    %p130 = pneg %p124
    %p131 = scmp.eq.s32.totalorder %s12, 1
    %p132 = por %p130, %p131
    %p133 = scmp.ne.s32.totalorder %s125, %s128
    %p134 = scmp.eq.s32.totalorder %s12, 0
    %p135 = por %p133, %p134
    %p136 = scmp.ne.s32.totalorder %s125, %s128
    %p137 = scmp.eq.s32.totalorder %s17, 1
    %p138 = por %p136, %p137
    %p139 = scmp.ne.s32.totalorder %s128, %s129
    %p140 = scmp.eq.s32.totalorder %s17, 0
    %p141 = por %p139, %p140
    %p142 = scmp.ne.s32.totalorder %s128, %s129
    %p143 = scmp.eq.s32.totalorder %s18, 1
    %p144 = por %p142, %p143
    %p146 = scmp.ne.s32.totalorder %s129, %s145
    %p147 = scmp.eq.s32.totalorder %s18, 0
    %p148 = por %p146, %p147
    %s149 = ssub.s32 %s19, %s38
    %s150 = ssub.s32 %s20, %s34
    %s151 = sor.u32 %s149, %s150
    %p152 = scmp.eq.s32.totalorder %s151, 0
    %s154 = sadd.s32 %s153, 1
    %s155 = scalar_select %p152, %s153, %s154
    %p158 = pneg %p152
    %p159 = scmp.eq.s32.totalorder %s12, 1
    %p160 = por %p158, %p159
    %p161 = scmp.ne.s32.totalorder %s153, %s156
    %p162 = scmp.eq.s32.totalorder %s12, 0
    %p163 = por %p161, %p162
    %p164 = scmp.ne.s32.totalorder %s153, %s156
    %p165 = scmp.eq.s32.totalorder %s17, 1
    %p166 = por %p164, %p165
    %p167 = scmp.ne.s32.totalorder %s156, %s157
    %p168 = scmp.eq.s32.totalorder %s17, 0
    %p169 = por %p167, %p168
    %p170 = scmp.ne.s32.totalorder %s156, %s157
    %p171 = scmp.eq.s32.totalorder %s18, 1
    %p172 = por %p170, %p171
    %p174 = scmp.ne.s32.totalorder %s157, %s173
    %p175 = scmp.eq.s32.totalorder %s18, 0
    %p176 = por %p174, %p175
    %p177 = scmp.le.s32.totalorder 1, %s12
    %p178 = scmp.lt.s32.totalorder %s12, 3
    %p179 = pnand %p177, %p178
    %p180 = pneg %p179
    // Predicated region
    $region9: #{conv3d_bn_forward.2} parent=5 // pred_check
      _
    $region10: #{conv3d_bn_forward.2} parent=5 // pred_check_branch
      %182 = sbr.rel (%p179) target = $region12
    $region11: #{conv3d_bn_forward.2} parent=5 // pred_region
      %s183 = ssub.s32 %s12, 1
      // Predicated region
      $region13: #{conv3d_bn_forward.2} parent=11 // pred_check
        %p184 = pneg %p57
      $region14: #{conv3d_bn_forward.2} parent=11 // pred_check_branch
        %186 = sbr.rel (%p184) target = $region16
      $region15: #{conv3d_bn_forward.2} parent=11 // pred_region
        %s187 = smul.u32 2, %s23
        %p188 = scmp.lt.s32.totalorder %s187, 1
        %s189 = scalar_select %p188, %s187, 1
        %s190 = smul.addr %s189, 4
        %s191 = scalar_lea.vmem %s1, %s190
        %s192 = smul.u32 2, %s23
      $region16: #{conv3d_bn_forward.2} parent=11 // pred_fallthru
        _
      // Predicated region
      $region17: #{conv3d_bn_forward.2} parent=11 // pred_check
        %p193 = pneg %p83
      $region18: #{conv3d_bn_forward.2} parent=11 // pred_check_branch
        %195 = sbr.rel (%p193) target = $region20
      $region19: #{conv3d_bn_forward.2} parent=11 // pred_region
        %s196 = smul.u32 4, %s24
        %p197 = scmp.lt.s32.totalorder %s196, 3
        %s198 = scalar_select %p197, %s196, 3
        %s199 = scalar_lea.vmem %s2, %s198
        %s200 = smul.u32 4, %s24
      $region20: #{conv3d_bn_forward.2} parent=11 // pred_fallthru
        _
    $region12: #{conv3d_bn_forward.2} parent=5 // pred_fallthru
      _
    %p201 = scmp.lt.s32.totalorder %s12, 2
    // Predicated region
    $region21: #{conv3d_bn_forward.2} parent=5 // pred_check
      %p202 = pneg %p201
    $region22: #{conv3d_bn_forward.2} parent=5 // pred_check_branch
      %204 = sbr.rel (%p202) target = $region24
    $region23: #{conv3d_bn_forward.2} parent=5 // pred_region
      _
    $region24: #{conv3d_bn_forward.2} parent=5 // pred_fallthru
      _
    %p205 = scmp.le.s32.totalorder 1, %s12
    %p206 = scmp.lt.s32.totalorder %s12, 3
    %p207 = pnand %p205, %p206
    %p208 = pneg %p207
    // Predicated region
    $region25: #{conv3d_bn_forward.2} parent=5 // pred_check
      _
    $region26: #{conv3d_bn_forward.2} parent=5 // pred_check_branch
      %210 = sbr.rel (%p207) target = $region28
    $region27: #{conv3d_bn_forward.2} parent=5 // pred_region
      %s211 = ssub.s32 %s12, 1
      %s212 = smul.u32 2, %s23
      %p213 = scmp.lt.s32.totalorder %s212, 1
      %s214 = scalar_select %p213, %s212, 1
      %s215 = smul.addr %s214, 4
      %s216 = scalar_lea.vmem %s1, %s215
      %p217 = pneg %p57
      %p218 = pneg %p54
      %s219 = smul.u32 4, %s24
      %p220 = scmp.lt.s32.totalorder %s219, 3
      %s221 = scalar_select %p220, %s219, 3
      %s222 = scalar_lea.vmem %s2, %s221
      %p223 = pneg %p83
      %p224 = pneg %p80
      %p225 = pneg %p113
      %p226 = pneg %p110
      %s227 = smul.u32 2, %s23
      %s228 = smul.u32 4, %s24
      %p229 = scmp.lt.s32.totalorder %s22, 1
      %s230 = scalar_select %p229, %s22, 1
      %p231 = scmp.lt.s32.totalorder %s227, 1
      %s232 = scalar_select %p231, %s227, 1
      %p233 = scmp.lt.s32.totalorder %s228, 3
      %s234 = scalar_select %p233, %s228, 3
      %s235 = smul.addr %s232, 4
      %s236 = sadd.s32 %s234, %s235
      %s237 = smul.addr %s230, 8
      %s238 = sadd.s32 %s236, %s237
      %s239 = smul.addr %s238, 4
      %s240 = scalar_lea.vmem %s3, %s239
      %p241 = pneg %p141
      %p242 = pneg %p138
      %s243 = smul.u32 2, %s23
      %p244 = scmp.lt.s32.totalorder %s22, 1
      %s245 = scalar_select %p244, %s22, 1
      %p246 = scmp.lt.s32.totalorder %s243, 1
      %s247 = scalar_select %p246, %s243, 1
      %s248 = smul.addr %s245, 2
      %s249 = sadd.s32 %s247, %s248
      %s250 = smul.addr %s249, 8
      %s251 = scalar_lea.vmem %s4, %s250
      %p252 = pneg %p169
      %p253 = pneg %p166
      %s254 = smul.u32 2, %s23
      %p255 = scmp.lt.s32.totalorder %s22, 1
      %s256 = scalar_select %p255, %s22, 1
      %p257 = scmp.lt.s32.totalorder %s254, 1
      %s258 = scalar_select %p257, %s254, 1
      %s259 = smul.addr %s256, 2
      %s260 = sadd.s32 %s258, %s259
      %s261 = smul.addr %s260, 8
      %s262 = scalar_lea.vmem %s5, %s261
      %s263 = smul.u32 2, %s23
      %p264 = scmp.lt.s32.totalorder %s263, 1
      %s265 = scalar_select %p264, %s263, 1
      %s266 = smul.addr %s265, 4
      %s267 = scalar_lea.vmem %s1, %s266
      %s268 = smul.u32 2, %s23
      %s269 = smul.u32 4, %s24
      %p270 = scmp.lt.s32.totalorder %s269, 3
      %s271 = scalar_select %p270, %s269, 3
      %s272 = scalar_lea.vmem %s2, %s271
      %s273 = smul.u32 4, %s24
      %s274 = smul.u32 2, %s23
      %s275 = smul.u32 4, %s24
      %p276 = scmp.lt.s32.totalorder %s22, 1
      %s277 = scalar_select %p276, %s22, 1
      %p278 = scmp.lt.s32.totalorder %s274, 1
      %s279 = scalar_select %p278, %s274, 1
      %p280 = scmp.lt.s32.totalorder %s275, 3
      %s281 = scalar_select %p280, %s275, 3
      %s282 = smul.addr %s279, 4
      %s283 = sadd.s32 %s281, %s282
      %s284 = smul.addr %s277, 8
      %s285 = sadd.s32 %s283, %s284
      %s286 = smul.addr %s285, 4
      %s287 = scalar_lea.vmem %s3, %s286
      %s288 = smul.u32 2, %s23
      %s289 = smul.u32 4, %s24
      %s290 = smul.u32 2, %s23
      %p291 = scmp.lt.s32.totalorder %s22, 1
      %s292 = scalar_select %p291, %s22, 1
      %p293 = scmp.lt.s32.totalorder %s290, 1
      %s294 = scalar_select %p293, %s290, 1
      %s295 = smul.addr %s292, 2
      %s296 = sadd.s32 %s294, %s295
      %s297 = smul.addr %s296, 8
      %s298 = scalar_lea.vmem %s4, %s297
      %s299 = smul.u32 2, %s23
      %s300 = smul.u32 2, %s23
      %p301 = scmp.lt.s32.totalorder %s22, 1
      %s302 = scalar_select %p301, %s22, 1
      %p303 = scmp.lt.s32.totalorder %s300, 1
      %s304 = scalar_select %p303, %s300, 1
      %s305 = smul.addr %s302, 2
      %s306 = sadd.s32 %s304, %s305
      %s307 = smul.addr %s306, 8
      %s308 = scalar_lea.vmem %s5, %s307
      %s309 = smul.u32 2, %s23
      %p311 = scmp.lt.s32.totalorder %s24, 0
      %s312 = ssub.s32 0, %s24
      %s313 = scalar_select %p311, %s312, %s24
      %s314 = sand.u32 %s313, 1
      %s315 = ssub.s32 0, %s314
      %s316 = scalar_select %p311, %s315, %s314
      %p317 = scmp.ne.s32.totalorder %s316, 0
      %p318 = scmp.lt.s32.totalorder %s316, 0
      %p319 = pnand %p318, %p317
      %p320 = pneg %p319
      %s321 = sadd.s32 %s316, 2
      %s322 = scalar_select %p320, %s321, %s316
      %p323 = scmp.eq.s32.totalorder %s24, 0
      // Predicated region
      $region29: #{conv3d_bn_forward.2} parent=27 // pred_check
        %p324 = pneg %p323
      $region30: #{conv3d_bn_forward.2} parent=27 // pred_check_branch
        %326 = sbr.rel (%p324) target = $region32
      $region31: #{conv3d_bn_forward.2} parent=27 // pred_region
        %s327 = smul.u32 %s24, 512
        %s328 = smul.u32 %s322, 16
        %s329 = sshra.s32 %s327, 7
        %s330 = sand.u32 %s327, 127
        %s331 = smul.u32 %s22, 8
        %s332 = sadd.s32 %s329, %s331
        %s333 = smul.addr %s332, 4
        %s334 = scalar_lea.vmem %s0, %s333
        %s335 = sshra.s32 %s328, 4
        %s336 = sand.u32 %s328, 15
        %s337 = smul.u32 %s335, 4
        %s338 = smul.addr %s337, 8
        %s339 = scalar_lea.vmem [#allocation2], %s338
        %s340 = scalar_lea.sflag [#allocation3], %s322
        %p342 = scmp.lt.u32.totalorder 4, 8
        %p343 = pneg %p342
        // Predicated region
        $region33: #{conv3d_bn_forward.2} parent=31 // pred_check
          _
        $region34: #{conv3d_bn_forward.2} parent=31 // pred_check_branch
          %345 = sbr.rel (%p342) target = $region36
        $region35: #{conv3d_bn_forward.2} parent=31 // pred_region
          %s374 = sand.u32 4, 7
          %p375 = scmp.eq.s32.totalorder %s374, 0
          %p376 = pneg %p375
          // Predicated region
          $region48: #{conv3d_bn_forward.2} parent=35 // pred_check
            _
          $region49: #{conv3d_bn_forward.2} parent=35 // pred_check_branch
            %378 = sbr.rel (%p375) target = $region51
          $region50: #{conv3d_bn_forward.2} parent=35 // pred_region
            %s379 = sand.u32 4, 7
            %s380 = ssub.s32 4, %s379
            %s381 = scalar_lea.vmem %s334, %s380
            %s382 = ssub.s32 4, %s379
            %s383 = scalar_lea.vmem %s339, %s382 [#allocation2]
            loop: start=0, step=1, limit=1
            $region52: #{conv3d_bn_forward.2} parent=50 // loop_pre_header
              _
            $region53: #{conv3d_bn_forward.2} parent=50 // loop_header
              %s385 = sphi 0, %s389
              %p386 = scmp.ge.s32.totalorder %s385, 1
              %s390 = sphi %s334, %s334
              %s391 = sphi %s339, %s339
            $region54: #{conv3d_bn_forward.2} parent=50 // loop_header_branch
              %388 = sbr.rel (%p386) target = $region58
            $region55: #{conv3d_bn_forward.2} parent=50 // loop_body
              _
            $region56: #{conv3d_bn_forward.2} parent=50 // loop_footer
              %s389 = sadd.s32 1, %s385
            $region57: #{conv3d_bn_forward.2} parent=50 // loop_footer_branch
              %384 = sbr.rel target = $region53
            $region58: #{conv3d_bn_forward.2} parent=50 // loop_exit
              _
            %s392 = sshllo.u32 0, %s379
            loop: start=0, step=1, limit=1
            $region59: #{conv3d_bn_forward.2} parent=50 // loop_pre_header
              _
            $region60: #{conv3d_bn_forward.2} parent=50 // loop_header
              %s394 = sphi 0, %s398
              %p395 = scmp.ge.s32.totalorder %s394, 1
              %s399 = sphi %s381, %s381
              %s400 = sphi %s383, %s383
            $region61: #{conv3d_bn_forward.2} parent=50 // loop_header_branch
              %397 = sbr.rel (%p395) target = $region65
            $region62: #{conv3d_bn_forward.2} parent=50 // loop_body
              %v401 = vld [vmem:[%s399] sm:%s392]
              %402 = vst [vmem:[%s400] sm:%s392] %v401
              %v403 = vld [vmem:[%s399 + $0x10] sm:%s392]
              %404 = vst [vmem:[%s400 + $0x4] sm:%s392] %v403
              %v405 = vld [vmem:[%s399 + $0x4] sm:%s392]
              %406 = vst [vmem:[%s400 + $0x8] sm:%s392] %v405
              %v407 = vld [vmem:[%s399 + $0x14] sm:%s392]
              %408 = vst [vmem:[%s400 + $0xc] sm:%s392] %v407
              %v409 = vld [vmem:[%s399 + $0x8] sm:%s392]
              %410 = vst [vmem:[%s400 + $0x10] sm:%s392] %v409
              %v411 = vld [vmem:[%s399 + $0x18] sm:%s392]
              %412 = vst [vmem:[%s400 + $0x14] sm:%s392] %v411
              %v413 = vld [vmem:[%s399 + $0xc] sm:%s392]
              %414 = vst [vmem:[%s400 + $0x18] sm:%s392] %v413
              %v415 = vld [vmem:[%s399 + $0x1c] sm:%s392]
              %416 = vst [vmem:[%s400 + $0x1c] sm:%s392] %v415
            $region63: #{conv3d_bn_forward.2} parent=50 // loop_footer
              %s398 = sadd.s32 1, %s394
            $region64: #{conv3d_bn_forward.2} parent=50 // loop_footer_branch
              %393 = sbr.rel target = $region60
            $region65: #{conv3d_bn_forward.2} parent=50 // loop_exit
              _
          $region51: #{conv3d_bn_forward.2} parent=35 // pred_fallthru
            _
        $region36: #{conv3d_bn_forward.2} parent=31 // pred_fallthru
          _
        // Predicated region
        $region37: #{conv3d_bn_forward.2} parent=31 // pred_check
          %p346 = pneg %p342
        $region38: #{conv3d_bn_forward.2} parent=31 // pred_check_branch
          %348 = sbr.rel (%p346) target = $region40
        $region39: #{conv3d_bn_forward.2} parent=31 // pred_region
          %s349 = sshllo.u32 0, 4
          loop: start=0, step=1, limit=1
          $region41: #{conv3d_bn_forward.2} parent=39 // loop_pre_header
            _
          $region42: #{conv3d_bn_forward.2} parent=39 // loop_header
            %s351 = sphi 0, %s355
            %p352 = scmp.ge.s32.totalorder %s351, 1
            %s356 = sphi %s334, %s334
            %s357 = sphi %s339, %s339
          $region43: #{conv3d_bn_forward.2} parent=39 // loop_header_branch
            %354 = sbr.rel (%p352) target = $region47
          $region44: #{conv3d_bn_forward.2} parent=39 // loop_body
            %v358 = vld [vmem:[%s356] sm:%s349]
            %359 = vst [vmem:[%s357] sm:%s349] %v358
            %v360 = vld [vmem:[%s356 + $0x10] sm:%s349]
            %361 = vst [vmem:[%s357 + $0x4] sm:%s349] %v360
            %v362 = vld [vmem:[%s356 + $0x4] sm:%s349]
            %363 = vst [vmem:[%s357 + $0x8] sm:%s349] %v362
            %v364 = vld [vmem:[%s356 + $0x14] sm:%s349]
            %365 = vst [vmem:[%s357 + $0xc] sm:%s349] %v364
            %v366 = vld [vmem:[%s356 + $0x8] sm:%s349]
            %367 = vst [vmem:[%s357 + $0x10] sm:%s349] %v366
            %v368 = vld [vmem:[%s356 + $0x18] sm:%s349]
            %369 = vst [vmem:[%s357 + $0x14] sm:%s349] %v368
            %v370 = vld [vmem:[%s356 + $0xc] sm:%s349]
            %371 = vst [vmem:[%s357 + $0x18] sm:%s349] %v370
            %v372 = vld [vmem:[%s356 + $0x1c] sm:%s349]
            %373 = vst [vmem:[%s357 + $0x1c] sm:%s349] %v372
          $region45: #{conv3d_bn_forward.2} parent=39 // loop_footer
            %s355 = sadd.s32 1, %s351
          $region46: #{conv3d_bn_forward.2} parent=39 // loop_footer_branch
            %350 = sbr.rel target = $region42
          $region47: #{conv3d_bn_forward.2} parent=39 // loop_exit
            _
        $region40: #{conv3d_bn_forward.2} parent=31 // pred_fallthru
          _
        // Predicated region
        $region66: #{conv3d_bn_forward.2} parent=31 // pred_check
          _
        $region67: #{conv3d_bn_forward.2} parent=31 // pred_check_branch
          %419 = sbr.rel (0) target = $region69
        $region68: #{conv3d_bn_forward.2} parent=31 // pred_region
          %420 = vsyncadd %s340, 512
        $region69: #{conv3d_bn_forward.2} parent=31 // pred_fallthru
          _
        %vm421 = vcmask 7168
        %422 = vst.msk [vmem:[#allocation5] sm:$0xff] %vm421, 0.0
        %423 = vst.msk [vmem:[#allocation5 + $0x8] sm:$0xff] %vm421, 0.0
        %424 = vst.msk [vmem:[#allocation6] sm:$0xff] %vm421, 0.0
        %425 = vst.msk [vmem:[#allocation6 + $0x8] sm:$0xff] %vm421, 0.0
      $region32: #{conv3d_bn_forward.2} parent=27 // pred_fallthru
        _
      %s426 = sadd.s32 %s24, 1
      %p427 = scmp.lt.s32.totalorder %s426, 1
      // Predicated region
      $region70: #{conv3d_bn_forward.2} parent=27 // pred_check
        %p428 = pneg %p427
      $region71: #{conv3d_bn_forward.2} parent=27 // pred_check_branch
        %430 = sbr.rel (%p428) target = $region73
      $region72: #{conv3d_bn_forward.2} parent=27 // pred_region
        %s431 = ssub.s32 1, %s322
        %s432 = smul.u32 %s426, 512
        %s433 = smul.u32 %s431, 16
        %s434 = sshra.s32 %s432, 7
        %s435 = sand.u32 %s432, 127
        %s436 = smul.u32 %s22, 8
        %s437 = sadd.s32 %s434, %s436
        %s438 = smul.addr %s437, 4
        %s439 = scalar_lea.vmem %s0, %s438
        %s440 = sshra.s32 %s433, 4
        %s441 = sand.u32 %s433, 15
        %s442 = smul.u32 %s440, 4
        %s443 = smul.addr %s442, 8
        %s444 = scalar_lea.vmem [#allocation2], %s443
        %s445 = scalar_lea.sflag [#allocation3], %s431
        %p447 = scmp.lt.u32.totalorder 4, 8
        %p448 = pneg %p447
        // Predicated region
        $region74: #{conv3d_bn_forward.2} parent=72 // pred_check
          _
        $region75: #{conv3d_bn_forward.2} parent=72 // pred_check_branch
          %450 = sbr.rel (%p447) target = $region77
        $region76: #{conv3d_bn_forward.2} parent=72 // pred_region
          %s479 = sand.u32 4, 7
          %p480 = scmp.eq.s32.totalorder %s479, 0
          %p481 = pneg %p480
          // Predicated region
          $region89: #{conv3d_bn_forward.2} parent=76 // pred_check
            _
          $region90: #{conv3d_bn_forward.2} parent=76 // pred_check_branch
            %483 = sbr.rel (%p480) target = $region92
          $region91: #{conv3d_bn_forward.2} parent=76 // pred_region
            %s484 = sand.u32 4, 7
            %s485 = ssub.s32 4, %s484
            %s486 = scalar_lea.vmem %s439, %s485
            %s487 = ssub.s32 4, %s484
            %s488 = scalar_lea.vmem %s444, %s487 [#allocation2]
            loop: start=0, step=1, limit=1
            $region93: #{conv3d_bn_forward.2} parent=91 // loop_pre_header
              _
            $region94: #{conv3d_bn_forward.2} parent=91 // loop_header
              %s490 = sphi 0, %s494
              %p491 = scmp.ge.s32.totalorder %s490, 1
              %s495 = sphi %s439, %s439
              %s496 = sphi %s444, %s444
            $region95: #{conv3d_bn_forward.2} parent=91 // loop_header_branch
              %493 = sbr.rel (%p491) target = $region99
            $region96: #{conv3d_bn_forward.2} parent=91 // loop_body
              _
            $region97: #{conv3d_bn_forward.2} parent=91 // loop_footer
              %s494 = sadd.s32 1, %s490
            $region98: #{conv3d_bn_forward.2} parent=91 // loop_footer_branch
              %489 = sbr.rel target = $region94
            $region99: #{conv3d_bn_forward.2} parent=91 // loop_exit
              _
            %s497 = sshllo.u32 0, %s484
            loop: start=0, step=1, limit=1
            $region100: #{conv3d_bn_forward.2} parent=91 // loop_pre_header
              _
            $region101: #{conv3d_bn_forward.2} parent=91 // loop_header
              %s499 = sphi 0, %s503
              %p500 = scmp.ge.s32.totalorder %s499, 1
              %s504 = sphi %s486, %s486
              %s505 = sphi %s488, %s488
            $region102: #{conv3d_bn_forward.2} parent=91 // loop_header_branch
              %502 = sbr.rel (%p500) target = $region106
            $region103: #{conv3d_bn_forward.2} parent=91 // loop_body
              %v506 = vld [vmem:[%s504] sm:%s497]
              %507 = vst [vmem:[%s505] sm:%s497] %v506
              %v508 = vld [vmem:[%s504 + $0x10] sm:%s497]
              %509 = vst [vmem:[%s505 + $0x4] sm:%s497] %v508
              %v510 = vld [vmem:[%s504 + $0x4] sm:%s497]
              %511 = vst [vmem:[%s505 + $0x8] sm:%s497] %v510
              %v512 = vld [vmem:[%s504 + $0x14] sm:%s497]
              %513 = vst [vmem:[%s505 + $0xc] sm:%s497] %v512
              %v514 = vld [vmem:[%s504 + $0x8] sm:%s497]
              %515 = vst [vmem:[%s505 + $0x10] sm:%s497] %v514
              %v516 = vld [vmem:[%s504 + $0x18] sm:%s497]
              %517 = vst [vmem:[%s505 + $0x14] sm:%s497] %v516
              %v518 = vld [vmem:[%s504 + $0xc] sm:%s497]
              %519 = vst [vmem:[%s505 + $0x18] sm:%s497] %v518
              %v520 = vld [vmem:[%s504 + $0x1c] sm:%s497]
              %521 = vst [vmem:[%s505 + $0x1c] sm:%s497] %v520
            $region104: #{conv3d_bn_forward.2} parent=91 // loop_footer
              %s503 = sadd.s32 1, %s499
            $region105: #{conv3d_bn_forward.2} parent=91 // loop_footer_branch
              %498 = sbr.rel target = $region101
            $region106: #{conv3d_bn_forward.2} parent=91 // loop_exit
              _
          $region92: #{conv3d_bn_forward.2} parent=76 // pred_fallthru
            _
        $region77: #{conv3d_bn_forward.2} parent=72 // pred_fallthru
          _
        // Predicated region
        $region78: #{conv3d_bn_forward.2} parent=72 // pred_check
          %p451 = pneg %p447
        $region79: #{conv3d_bn_forward.2} parent=72 // pred_check_branch
          %453 = sbr.rel (%p451) target = $region81
        $region80: #{conv3d_bn_forward.2} parent=72 // pred_region
          %s454 = sshllo.u32 0, 4
          loop: start=0, step=1, limit=1
          $region82: #{conv3d_bn_forward.2} parent=80 // loop_pre_header
            _
          $region83: #{conv3d_bn_forward.2} parent=80 // loop_header
            %s456 = sphi 0, %s460
            %p457 = scmp.ge.s32.totalorder %s456, 1
            %s461 = sphi %s439, %s439
            %s462 = sphi %s444, %s444
          $region84: #{conv3d_bn_forward.2} parent=80 // loop_header_branch
            %459 = sbr.rel (%p457) target = $region88
          $region85: #{conv3d_bn_forward.2} parent=80 // loop_body
            %v463 = vld [vmem:[%s461] sm:%s454]
            %464 = vst [vmem:[%s462] sm:%s454] %v463
            %v465 = vld [vmem:[%s461 + $0x10] sm:%s454]
            %466 = vst [vmem:[%s462 + $0x4] sm:%s454] %v465
            %v467 = vld [vmem:[%s461 + $0x4] sm:%s454]
            %468 = vst [vmem:[%s462 + $0x8] sm:%s454] %v467
            %v469 = vld [vmem:[%s461 + $0x14] sm:%s454]
            %470 = vst [vmem:[%s462 + $0xc] sm:%s454] %v469
            %v471 = vld [vmem:[%s461 + $0x8] sm:%s454]
            %472 = vst [vmem:[%s462 + $0x10] sm:%s454] %v471
            %v473 = vld [vmem:[%s461 + $0x18] sm:%s454]
            %474 = vst [vmem:[%s462 + $0x14] sm:%s454] %v473
            %v475 = vld [vmem:[%s461 + $0xc] sm:%s454]
            %476 = vst [vmem:[%s462 + $0x18] sm:%s454] %v475
            %v477 = vld [vmem:[%s461 + $0x1c] sm:%s454]
            %478 = vst [vmem:[%s462 + $0x1c] sm:%s454] %v477
          $region86: #{conv3d_bn_forward.2} parent=80 // loop_footer
            %s460 = sadd.s32 1, %s456
          $region87: #{conv3d_bn_forward.2} parent=80 // loop_footer_branch
            %455 = sbr.rel target = $region83
          $region88: #{conv3d_bn_forward.2} parent=80 // loop_exit
            _
        $region81: #{conv3d_bn_forward.2} parent=72 // pred_fallthru
          _
        // Predicated region
        $region107: #{conv3d_bn_forward.2} parent=72 // pred_check
          _
        $region108: #{conv3d_bn_forward.2} parent=72 // pred_check_branch
          %524 = sbr.rel (0) target = $region110
        $region109: #{conv3d_bn_forward.2} parent=72 // pred_region
          %525 = vsyncadd %s445, 512
        $region110: #{conv3d_bn_forward.2} parent=72 // pred_fallthru
          _
      $region73: #{conv3d_bn_forward.2} parent=27 // pred_fallthru
        _
      %s526 = smul.u32 %s24, 512
      %s527 = smul.u32 %s322, 16
      %s528 = scalar_lea.sflag [#allocation3], %s322
      %s529 = smul.u32 4, 2
      %s530 = smul.u32 %s529, 4
      %s531 = sshll.u32 %s530, 4
      %532 = dma.done %s528, %s531
      %v533 = vld [vmem:[%s267] sm:$0xf]
      %v534 = vld [vmem:[%s267 + $0x4] sm:$0xf]
      %s535 = sshra.s32 %s527, 4
      %s536 = sand.u32 %s527, 15
      %s537 = smul.u32 %s535, 4
      %s538 = smul.addr %s537, 8
      %s539 = scalar_lea.vmem [#allocation2], %s538
      %v540 = vld [vmem:[%s539] sm:$0xff]
      %v541 = vld [vmem:[%s539 + $0x8] sm:$0xff]
      %v542 = vld [vmem:[%s539 + $0x10] sm:$0xff]
      %v543 = vld [vmem:[%s539 + $0x18] sm:$0xff]
      %v546 = vunpack.c.l.b16 %v533
      %v547 = vunpack.c.l.b16 %v534
      %v548 = vpack.c.b16 %v547, %v546
      %vm549 = vcmask 130048
      %v551 = vsel %vm549, %v548, 0
      %553 = vmatprep.subr.bf16.mxu0 %v541
      %554 = vmatpush1.bf16.msra.mxu0 %v540
      %555 = vmatprep.subr.bf16.mxu0 0
      %556 = vmatpush1.bf16.msra.mxu0 0
      %557 = vmatprep.subr.bf16.mxu0 0
      %558 = vmatpush1.bf16.msra.mxu0 0
      %559 = vmatprep.subr.bf16.mxu0 0
      %560 = vmatpush1.bf16.msra.mxu0 0
      %561 = vmatprep.subr.bf16.mxu0 0
      %562 = vmatpush1.bf16.msra.mxu0 0
      %563 = vmatprep.subr.bf16.mxu0 0
      %564 = vmatpush1.bf16.msra.mxu0 0
      %565 = vmatprep.subr.bf16.mxu0 0
      %566 = vmatpush1.bf16.msra.mxu0 0
      %567 = vmatprep.subr.bf16.mxu0 0
      %568 = vmatpush1.bf16.msra.mxu0 0
      %569 = vmatprep.subr.bf16.mxu0 0
      %570 = vmatpush1.bf16.msra.mxu0 0
      %571 = vmatprep.subr.bf16.mxu0 0
      %572 = vmatpush1.bf16.msra.mxu0 0
      %573 = vmatprep.subr.bf16.mxu0 0
      %574 = vmatpush1.bf16.msra.mxu0 0
      %575 = vmatprep.subr.bf16.mxu0 0
      %576 = vmatpush1.bf16.msra.mxu0 0
      %577 = vmatprep.subr.bf16.mxu0 0
      %578 = vmatpush1.bf16.msra.mxu0 0
      %579 = vmatprep.subr.bf16.mxu0 0
      %580 = vmatpush1.bf16.msra.mxu0 0
      %581 = vmatprep.subr.bf16.mxu0 0
      %582 = vmatpush1.bf16.msra.mxu0 0
      %583 = vmatprep.subr.bf16.mxu0 0
      %584 = vmatpush1.bf16.msra.mxu0 0
      %585 = vmatprep.mubr.bf16.mxu0 0
      %586 = vmatmul.mubr.bf16.gmra.mrb[0].mxu0 %v551
      %v587 = vpop.f32.mrb[0].mxu0
      %v588 = vadd.f32 0.0, %v587
      %v589 = vpop.f32.mrb[0].mxu0
      %v590 = vadd.f32 0.0, %v589
      %v591 = vpop.f32.mrb[0].mxu0
      %v592 = vadd.f32 0.0, %v591
      %v593 = vpop.f32.mrb[0].mxu0
      %v594 = vadd.f32 0.0, %v593
      %595 = vdwg.mxu0
      %596 = vmatprep.subr.bf16.mxu0 %v543
      %597 = vmatpush1.bf16.msra.mxu0 %v542
      %598 = vmatprep.subr.bf16.mxu0 0
      %599 = vmatpush1.bf16.msra.mxu0 0
      %600 = vmatprep.subr.bf16.mxu0 0
      %601 = vmatpush1.bf16.msra.mxu0 0
      %602 = vmatprep.subr.bf16.mxu0 0
      %603 = vmatpush1.bf16.msra.mxu0 0
      %604 = vmatprep.subr.bf16.mxu0 0
      %605 = vmatpush1.bf16.msra.mxu0 0
      %606 = vmatprep.subr.bf16.mxu0 0
      %607 = vmatpush1.bf16.msra.mxu0 0
      %608 = vmatprep.subr.bf16.mxu0 0
      %609 = vmatpush1.bf16.msra.mxu0 0
      %610 = vmatprep.subr.bf16.mxu0 0
      %611 = vmatpush1.bf16.msra.mxu0 0
      %612 = vmatprep.subr.bf16.mxu0 0
      %613 = vmatpush1.bf16.msra.mxu0 0
      %614 = vmatprep.subr.bf16.mxu0 0
      %615 = vmatpush1.bf16.msra.mxu0 0
      %616 = vmatprep.subr.bf16.mxu0 0
      %617 = vmatpush1.bf16.msra.mxu0 0
      %618 = vmatprep.subr.bf16.mxu0 0
      %619 = vmatpush1.bf16.msra.mxu0 0
      %620 = vmatprep.subr.bf16.mxu0 0
      %621 = vmatpush1.bf16.msra.mxu0 0
      %622 = vmatprep.subr.bf16.mxu0 0
      %623 = vmatpush1.bf16.msra.mxu0 0
      %624 = vmatprep.subr.bf16.mxu0 0
      %625 = vmatpush1.bf16.msra.mxu0 0
      %626 = vmatprep.subr.bf16.mxu0 0
      %627 = vmatpush1.bf16.msra.mxu0 0
      %628 = vmatprep.mubr.bf16.mxu0 0
      %629 = vmatmul.mubr.bf16.gmra.mrb[0].mxu0 %v551
      %v630 = vpop.f32.mrb[0].mxu0
      %v631 = vadd.f32 0.0, %v630
      %v632 = vpop.f32.mrb[0].mxu0
      %v633 = vadd.f32 0.0, %v632
      %v634 = vpop.f32.mrb[0].mxu0
      %v635 = vadd.f32 0.0, %v634
      %v636 = vpop.f32.mrb[0].mxu0
      %v637 = vadd.f32 0.0, %v636
      %638 = vdwg.mxu0
      %v639 = vpack.c.bf16 %v592, %v588
      %v640 = vpack.c.bf16 %v594, %v590
      %v641 = vpack.c.bf16 %v635, %v631
      %v642 = vpack.c.bf16 %v637, %v633
      %v647 = vunpack.c.l.b16 %v639
      %v648 = vunpack.c.l.b16 %v640
      %v649 = vunpack.c.l.b16 %v641
      %v650 = vunpack.c.l.b16 %v642
      %v651 = vunpack.c.h.b16 %v639
      %v652 = vunpack.c.h.b16 %v640
      %v653 = vunpack.c.h.b16 %v641
      %v654 = vunpack.c.h.b16 %v642
      %v655 = vpack.c.b16 %v648, %v647
      %v656 = vpack.c.b16 %v650, %v649
      %v657 = vpack.c.b16 %v652, %v651
      %v658 = vpack.c.b16 %v654, %v653
      %663 = vst [vmem:[%s287] sm:$0xff] %v655
      %664 = vst [vmem:[%s287 + $0x8] sm:$0xff] %v656
      %665 = vst [vmem:[%s287 + $0x10] sm:$0xff] %v657
      %666 = vst [vmem:[%s287 + $0x18] sm:$0xff] %v658
      %v667 = vld [vmem:[%s272] sm:$0xf]
      %v669 = vlaneseq
      %v670 = vshrl.u32 %v669, 7
      %v671 = vsub.s32 0, %v670
      %v672 = vrot.slane %v667, %v671
      %v673 = vlaneseq
      %v674 = vshrl.u32 %v673, 7
      %v675 = vsub.s32 1, %v674
      %v676 = vrot.slane %v667, %v675
      %v677 = vlaneseq
      %v678 = vshrl.u32 %v677, 7
      %v679 = vsub.s32 2, %v678
      %v680 = vrot.slane %v667, %v679
      %v681 = vlaneseq
      %v682 = vshrl.u32 %v681, 7
      %v683 = vsub.s32 3, %v682
      %v684 = vrot.slane %v667, %v683
      %v689 = vmul.f32 %v588, %v672
      %v690 = vmul.f32 %v590, %v676
      %v691 = vmul.f32 %v631, %v680
      %v692 = vmul.f32 %v633, %v684
      %v693 = vmul.f32 %v592, %v672
      %v694 = vmul.f32 %v594, %v676
      %v695 = vmul.f32 %v635, %v680
      %v696 = vmul.f32 %v637, %v684
      %v697 = vld [vmem:[#allocation5] sm:$0xff]
      %v698 = vld [vmem:[#allocation5 + $0x8] sm:$0xff]
      %v699 = vadd.f32 %v689, %v690
      %v700 = vadd.f32 %v699, %v691
      %v701 = vadd.f32 %v700, %v692
      %702 = vadd.xlane.f32.xlu0 %v701
      %v703 = vpop.xlane.xlu0 %702
      %v704 = vadd.f32 %v693, %v694
      %v705 = vadd.f32 %v704, %v695
      %v706 = vadd.f32 %v705, %v696
      %707 = vadd.xlane.f32.xlu0 %v706
      %v708 = vpop.xlane.xlu0 %707
      %v709 = vadd.f32 %v697, %v703
      %v710 = vadd.f32 %v698, %v708
      %vm711 = vcmask 7168
      %712 = vst.msk [vmem:[#allocation5] sm:$0xff] %vm711, %v709
      %713 = vst.msk [vmem:[#allocation5 + $0x8] sm:$0xff] %vm711, %v710
      %v714 = vld [vmem:[#allocation6] sm:$0xff]
      %v715 = vld [vmem:[#allocation6 + $0x8] sm:$0xff]
      %v716 = vmul.f32 %v689, %v588
      %v717 = vmul.f32 %v690, %v590
      %v718 = vmul.f32 %v691, %v631
      %v719 = vmul.f32 %v692, %v633
      %v720 = vmul.f32 %v693, %v592
      %v721 = vmul.f32 %v694, %v594
      %v722 = vmul.f32 %v695, %v635
      %v723 = vmul.f32 %v696, %v637
      %v724 = vadd.f32 %v716, %v717
      %v725 = vadd.f32 %v724, %v718
      %v726 = vadd.f32 %v725, %v719
      %727 = vadd.xlane.f32.xlu0 %v726
      %v728 = vpop.xlane.xlu0 %727
      %v729 = vadd.f32 %v720, %v721
      %v730 = vadd.f32 %v729, %v722
      %v731 = vadd.f32 %v730, %v723
      %732 = vadd.xlane.f32.xlu0 %v731
      %v733 = vpop.xlane.xlu0 %732
      %v734 = vadd.f32 %v714, %v728
      %v735 = vadd.f32 %v715, %v733
      %736 = vst.msk [vmem:[#allocation6] sm:$0xff] %vm711, %v734
      %737 = vst.msk [vmem:[#allocation6 + $0x8] sm:$0xff] %vm711, %v735
      // Predicated region
      $region111: #{conv3d_bn_forward.2} parent=27 // pred_check
        %p738 = pneg %p323
      $region112: #{conv3d_bn_forward.2} parent=27 // pred_check_branch
        %740 = sbr.rel (%p738) target = $region114
      $region113: #{conv3d_bn_forward.2} parent=27 // pred_region
        %v741 = vld [vmem:[#allocation5] sm:$0xff]
        %v742 = vld [vmem:[#allocation5 + $0x8] sm:$0xff]
        %v743 = vmul.f32 %v741, 0.001953125
        %v744 = vmul.f32 %v742, 0.001953125
        %v745 = vld [vmem:[#allocation6] sm:$0xff]
        %v746 = vld [vmem:[#allocation6 + $0x8] sm:$0xff]
        %v747 = vmul.f32 %v745, 0.001953125
        %v748 = vmul.f32 %v746, 0.001953125
        %v749 = vmul.f32 %v743, %v743
        %v750 = vmul.f32 %v744, %v744
        %v751 = vsub.f32 %v747, %v749
        %v752 = vsub.f32 %v748, %v750
        %v753 = vmax.f32 %v751, 0.0
        %v754 = vmax.f32 %v752, 0.0
        %755 = vst.msk [vmem:[%s298] sm:$0xff] %vm711, %v743
        %756 = vst.msk [vmem:[%s298 + $0x8] sm:$0xff] %vm711, %v744
        %v757 = vadd.f32 %v753, 1e-05
        %v758 = vadd.f32 %v754, 1e-05
        %v759 = vrsqrt.pop %v757
        %v760 = vrsqrt.pop %v758
        %761 = vst.msk [vmem:[%s308] sm:$0xff] %vm711, %v759
        %762 = vst.msk [vmem:[%s308 + $0x8] sm:$0xff] %vm711, %v760
      $region114: #{conv3d_bn_forward.2} parent=27 // pred_fallthru
        _
      %s763 = smul.u32 2, %s23
      %s764 = smul.u32 4, %s24
      %p765 = scmp.lt.s32.totalorder %s22, 1
      %s766 = scalar_select %p765, %s22, 1
      %p767 = scmp.lt.s32.totalorder %s763, 1
      %s768 = scalar_select %p767, %s763, 1
      %p769 = scmp.lt.s32.totalorder %s764, 3
      %s770 = scalar_select %p769, %s764, 3
      %s771 = smul.addr %s768, 4
      %s772 = sadd.s32 %s770, %s771
      %s773 = smul.addr %s766, 8
      %s774 = sadd.s32 %s772, %s773
      %s775 = smul.addr %s774, 4
      %s776 = scalar_lea.vmem %s3, %s775
      %s777 = smul.u32 2, %s23
      %p778 = scmp.lt.s32.totalorder %s22, 1
      %s779 = scalar_select %p778, %s22, 1
      %p780 = scmp.lt.s32.totalorder %s777, 1
      %s781 = scalar_select %p780, %s777, 1
      %s782 = smul.addr %s779, 2
      %s783 = sadd.s32 %s781, %s782
      %s784 = smul.addr %s783, 8
      %s785 = scalar_lea.vmem %s4, %s784
      %s786 = smul.u32 2, %s23
      %p787 = scmp.lt.s32.totalorder %s22, 1
      %s788 = scalar_select %p787, %s22, 1
      %p789 = scmp.lt.s32.totalorder %s786, 1
      %s790 = scalar_select %p789, %s786, 1
      %s791 = smul.addr %s788, 2
      %s792 = sadd.s32 %s790, %s791
      %s793 = smul.addr %s792, 8
      %s794 = scalar_lea.vmem %s5, %s793
      // Predicated region
      $region115: #{conv3d_bn_forward.2} parent=27 // pred_check
        %p795 = pneg %p110
      $region116: #{conv3d_bn_forward.2} parent=27 // pred_check_branch
        %797 = sbr.rel (%p795) target = $region118
      $region117: #{conv3d_bn_forward.2} parent=27 // pred_region
        %s798 = smul.u32 2, %s23
        %s799 = smul.u32 4, %s24
      $region118: #{conv3d_bn_forward.2} parent=27 // pred_fallthru
        _
      // Predicated region
      $region119: #{conv3d_bn_forward.2} parent=27 // pred_check
        %p800 = pneg %p138
      $region120: #{conv3d_bn_forward.2} parent=27 // pred_check_branch
        %802 = sbr.rel (%p800) target = $region122
      $region121: #{conv3d_bn_forward.2} parent=27 // pred_region
        %s803 = smul.u32 2, %s23
      $region122: #{conv3d_bn_forward.2} parent=27 // pred_fallthru
        _
      // Predicated region
      $region123: #{conv3d_bn_forward.2} parent=27 // pred_check
        %p804 = pneg %p166
      $region124: #{conv3d_bn_forward.2} parent=27 // pred_check_branch
        %806 = sbr.rel (%p804) target = $region126
      $region125: #{conv3d_bn_forward.2} parent=27 // pred_region
        %s807 = smul.u32 2, %s23
      $region126: #{conv3d_bn_forward.2} parent=27 // pred_fallthru
        _
    $region28: #{conv3d_bn_forward.2} parent=5 // pred_fallthru
      _
    %p808 = scmp.le.s32.totalorder 2, %s12
    // Predicated region
    $region127: #{conv3d_bn_forward.2} parent=5 // pred_check
      %p809 = pneg %p808
    $region128: #{conv3d_bn_forward.2} parent=5 // pred_check_branch
      %811 = sbr.rel (%p809) target = $region130
    $region129: #{conv3d_bn_forward.2} parent=5 // pred_region
      %s812 = ssub.s32 %s12, 2
      // Predicated region
      $region131: #{conv3d_bn_forward.2} parent=129 // pred_check
        %p813 = pneg %p116
      $region132: #{conv3d_bn_forward.2} parent=129 // pred_check_branch
        %815 = sbr.rel (%p813) target = $region134
      $region133: #{conv3d_bn_forward.2} parent=129 // pred_region
        %s816 = smul.u32 2, %s26
        %s817 = smul.u32 4, %s27
        %p818 = scmp.lt.s32.totalorder %s25, 1
        %s819 = scalar_select %p818, %s25, 1
        %p820 = scmp.lt.s32.totalorder %s816, 1
        %s821 = scalar_select %p820, %s816, 1
        %p822 = scmp.lt.s32.totalorder %s817, 3
        %s823 = scalar_select %p822, %s817, 3
        %s824 = smul.addr %s821, 4
        %s825 = sadd.s32 %s823, %s824
        %s826 = smul.addr %s819, 8
        %s827 = sadd.s32 %s825, %s826
        %s828 = smul.addr %s827, 4
        %s829 = scalar_lea.vmem %s3, %s828
      $region134: #{conv3d_bn_forward.2} parent=129 // pred_fallthru
        _
      // Predicated region
      $region135: #{conv3d_bn_forward.2} parent=129 // pred_check
        %p830 = pneg %p144
      $region136: #{conv3d_bn_forward.2} parent=129 // pred_check_branch
        %832 = sbr.rel (%p830) target = $region138
      $region137: #{conv3d_bn_forward.2} parent=129 // pred_region
        %s833 = smul.u32 2, %s26
        %p834 = scmp.lt.s32.totalorder %s25, 1
        %s835 = scalar_select %p834, %s25, 1
        %p836 = scmp.lt.s32.totalorder %s833, 1
        %s837 = scalar_select %p836, %s833, 1
        %s838 = smul.addr %s835, 2
        %s839 = sadd.s32 %s837, %s838
        %s840 = smul.addr %s839, 8
        %s841 = scalar_lea.vmem %s4, %s840
      $region138: #{conv3d_bn_forward.2} parent=129 // pred_fallthru
        _
      // Predicated region
      $region139: #{conv3d_bn_forward.2} parent=129 // pred_check
        %p842 = pneg %p172
      $region140: #{conv3d_bn_forward.2} parent=129 // pred_check_branch
        %844 = sbr.rel (%p842) target = $region142
      $region141: #{conv3d_bn_forward.2} parent=129 // pred_region
        %s845 = smul.u32 2, %s26
        %p846 = scmp.lt.s32.totalorder %s25, 1
        %s847 = scalar_select %p846, %s25, 1
        %p848 = scmp.lt.s32.totalorder %s845, 1
        %s849 = scalar_select %p848, %s845, 1
        %s850 = smul.addr %s847, 2
        %s851 = sadd.s32 %s849, %s850
        %s852 = smul.addr %s851, 8
        %s853 = scalar_lea.vmem %s5, %s852
      $region142: #{conv3d_bn_forward.2} parent=129 // pred_fallthru
        _
    $region130: #{conv3d_bn_forward.2} parent=5 // pred_fallthru
      _
  $region6: #{conv3d_bn_forward.2} parent=0 // loop_footer
    %s16 = sadd.s32 1, %s12
  $region7: #{conv3d_bn_forward.2} parent=0 // loop_footer_branch
    %11 = sbr.rel target = $region3
  $region8: #{conv3d_bn_forward.2} parent=0 // loop_exit
    _
  %854 = vsyncmov [#allocation3]
  %s855 = vpop.sfrf %854
  %p856 = scmp.eq.s32.totalorder %s855, 0
  %p857 = pneg %p856
  %859 = shalt.err (%p857)
  %s860 = scalar_lea.sflag [#allocation3], 1
  %861 = vsyncmov %s860
  %s862 = vpop.sfrf %861
  %p863 = scmp.eq.s32.totalorder %s862, 0
  %p864 = pneg %p863
  %866 = shalt.err (%p864)

</llo_original>
